<compile_context>
chip_gen: v7x
topology: tpu7x:2x2x1
jax: 0.10.0
libtpu: 0.0.40
codegen_flags: <defaults>
</compile_context>

<pallas_src>
import jax
import jax.numpy as jnp
from jax.experimental import pallas as pl
from jax.experimental.pallas import tpu as pltpu

# --- small, module-consistent sizes -----------------------------------------
N = 16              # number of nodes
P = 2               # number of meta-path graphs
IN_SIZE = 8         # per-meta-path GAT input feature dim
HIDDEN = 8          # hidden_size (per-head GAT output dim)
HEADS = 2           # num_heads = [2]  (single HANLayer)
HD = HIDDEN * HEADS # flattened GAT output dim
SEM_HIDDEN = 128    # SemanticAttention hidden_size (hardcoded default)
OUT_SIZE = 4        # out_size of final predict layer
OUT_PAD = 128       # lane-dense padded output width (unmasked vst)
NEG_SLOPE = 0.2     # GAT leaky_relu negative slope (DGL default)


# --- fused kernel: GAT (all meta-paths) + semantic attention + predict --------
def _hgan_kernel(adj_ref, x_ref, wfc_ref, al_ref, ar_ref,
                 sw1_ref, sb1_ref, sw2_ref, sb2_ref, wp_ref, bp_ref,
                 out_ref, z_buf):
    # adj_ref: (P, N, N)            A[p, dst, src]
    # x_ref:   (N, IN_SIZE)
    # wfc_ref: (IN_SIZE, P*HD)      fc weights for all meta-paths, packed
    # al_ref / ar_ref: (P*HD, P*HEADS) block-diagonal attention vectors
    # sw1/sb1/sw2/sb2: semantic attention MLP
    # wp_ref:  (HD, OUT_PAD)        predict weight, zero-padded beyond OUT_SIZE
    # bp_ref:  (1, OUT_PAD)         predict bias, -1e30 beyond OUT_SIZE
    # out_ref: (N, OUT_PAD)         lane-dense output slab
    # z_buf:   (P*N, HD)            VMEM scratch for stacked semantic embeddings

    # --- node-level GAT: one fc matmul and one el/er matmul pair for everything ---
    x = x_ref[...]
    ft_all = jnp.dot(x, wfc_ref[...], preferred_element_type=jnp.float32)      # (N, P*HD)
    el_all = jnp.dot(ft_all, al_ref[...], preferred_element_type=jnp.float32)  # (N, P*HEADS) source
    er_all = jnp.dot(ft_all, ar_ref[...], preferred_element_type=jnp.float32)  # (N, P*HEADS) dest
    el_rows = jnp.transpose(el_all)                                            # (P*HEADS, N), one transpose

    for p in range(P):                       # static, tiny loops (no grid steps)
        mask = adj_ref[p] > 0.0              # (N_dst, N_src)
        for h in range(HEADS):
            idx = p * HEADS + h
            er = er_all[:, idx:idx + 1]      # (N, 1)
            el = el_rows[idx:idx + 1, :]     # (1, N)
            s = er + el                      # (N_dst, N_src)
            s = jnp.where(s >= 0.0, s, NEG_SLOPE * s)        # leaky_relu
            s = jnp.where(mask, s, -1e30)                    # mask non-edges
            m = jnp.max(s, axis=-1, keepdims=True)
            pexp = jnp.exp(s - m)                            # masked lanes underflow to 0
            denom = jnp.sum(pexp, axis=-1, keepdims=True)    # >= 1 (max term contributes 1)
            inv = pl.reciprocal(denom, approx=True)          # EUP slot
            col0 = p * HD + h * HIDDEN
            fth = ft_all[:, col0:col0 + HIDDEN]              # (N, HIDDEN)
            agg = jnp.dot(pexp, fth, preferred_element_type=jnp.float32) * inv
            # ELU: exp only on the clamped negative part
            out = jnp.where(agg > 0.0, agg, jnp.exp(jnp.minimum(agg, 0.0)) - 1.0)
            # write head directly into its slot of the stacked embedding (no concat)
            z_buf[p * N:(p + 1) * N, h * HIDDEN:(h + 1) * HIDDEN] = out

    # --- semantic attention: one batched projection over all (path, node) rows ---
    z2d = z_buf[...]                                                          # (P*N, HD)
    hproj = jnp.tanh(jnp.dot(z2d, sw1_ref[...],
                             preferred_element_type=jnp.float32) + sb1_ref[...])   # (P*N, 128)
    scores = jnp.dot(hproj, sw2_ref[...],
                     preferred_element_type=jnp.float32) + sb2_ref[...]       # (P*N, 1)

    # per-node softmax over the meta-path axis (dim=1 of torch's (N, P, HD) stack)
    sc = [scores[q * N:(q + 1) * N, :] for q in range(P)]
    m = sc[0]
    for q in range(1, P):
        m = jnp.maximum(m, sc[q])
    ex = [jnp.exp(s - m) for s in sc]
    den = ex[0]
    for q in range(1, P):
        den = den + ex[q]
    inv = pl.reciprocal(den, approx=True)
    fused = (ex[0] * inv) * z_buf[0:N, :]
    for q in range(1, P):
        fused = fused + (ex[q] * inv) * z_buf[q * N:(q + 1) * N, :]           # (N, HD)

    # --- predict + log_softmax on the lane-padded slab ---
    logits = jnp.dot(fused, wp_ref[...], preferred_element_type=jnp.float32) + bp_ref[...]
    lmax = jnp.max(logits, axis=-1, keepdims=True)                            # padded lanes are -1e30
    lse = jnp.log(jnp.sum(jnp.exp(logits - lmax), axis=-1, keepdims=True)) + lmax
    out_ref[...] = logits - lse                                               # (N, OUT_PAD) unmasked store


# --- parameter packing (layout plumbing, done once outside the kernel) --------
def pack_params(params):
    # fc weights of all meta-paths side by side: (IN_SIZE, P*HD)
    wfc = jnp.transpose(params["w_fc"], (1, 0, 2)).reshape(IN_SIZE, P * HD)
    # block-diagonal attention vectors: column (p*HEADS+h) selects head h of path p
    al_blk = jnp.zeros((P * HD, P * HEADS), jnp.float32)
    ar_blk = jnp.zeros((P * HD, P * HEADS), jnp.float32)
    for p in range(P):
        for h in range(HEADS):
            col = p * HEADS + h
            r0 = p * HD + h * HIDDEN
            al_blk = al_blk.at[r0:r0 + HIDDEN, col].set(params["attn_l"][p, h])
            ar_blk = ar_blk.at[r0:r0 + HIDDEN, col].set(params["attn_r"][p, h])
    # lane-dense predict weights: pad to 128 lanes; pad bias = -1e30 so the
    # padded lanes vanish inside the log_softmax
    wp_pad = jnp.zeros((HD, OUT_PAD), jnp.float32).at[:, :OUT_SIZE].set(params["pred_w"])
    bp_pad = jnp.full((1, OUT_PAD), -1e30, jnp.float32).at[:, :OUT_SIZE].set(params["pred_b"])
    return dict(wfc=wfc, al=al_blk, ar=ar_blk,
                sem_w1=params["sem_w1"], sem_b1=params["sem_b1"],
                sem_w2=params["sem_w2"], sem_b2=params["sem_b2"],
                wp=wp_pad, bp=bp_pad)


# --- wrapper: single pallas_call, no grid, z held in VMEM scratch -------------
def hgan_forward(adj, x, pp):
    out_pad = pl.pallas_call(
        _hgan_kernel,
        out_shape=jax.ShapeDtypeStruct((N, OUT_PAD), jnp.float32),
        scratch_shapes=[pltpu.VMEM((P * N, HD), jnp.float32)],
    )(adj, x, pp["wfc"], pp["al"], pp["ar"],
      pp["sem_w1"], pp["sem_b1"], pp["sem_w2"], pp["sem_b2"],
      pp["wp"], pp["bp"])
    return out_pad[:, :OUT_SIZE]


# --- pure-JAX reference (same math, no Pallas) --------------------------------
def reference_forward(adj, x, p):
    zs = []
    for i in range(P):
        ft = x @ p["w_fc"][i]
        heads = []
        for h in range(HEADS):
            fth = ft[:, h * HIDDEN:(h + 1) * HIDDEN]
            el = jnp.sum(fth * p["attn_l"][i, h], -1)
            er = jnp.sum(fth * p["attn_r"][i, h], -1)
            s = er[:, None] + el[None, :]
            s = jnp.where(s >= 0, s, NEG_SLOPE * s)
            mask = adj[i] > 0
            sm = jnp.where(mask, s, -1e30)
            m = sm.max(-1, keepdims=True)
            pe = jnp.where(mask, jnp.exp(s - m), 0.0)
            den = pe.sum(-1, keepdims=True)
            out = (pe @ fth) / jnp.maximum(den, 1e-30)
            heads.append(jnp.where(out > 0, out, jnp.exp(jnp.minimum(out, 0.0)) - 1.0))
        zs.append(jnp.concatenate(heads, -1))
    z = jnp.stack(zs, 0)                                                 # (P, N, HD)
    scores = jnp.stack(
        [jnp.tanh(z[i] @ p["sem_w1"] + p["sem_b1"]) @ p["sem_w2"] + p["sem_b2"]
         for i in range(P)], 0)                                          # (P, N, 1)
    beta = jax.nn.softmax(scores, axis=0)
    fused = (beta * z).sum(0)
    logits = fused @ p["pred_w"] + p["pred_b"]
    return jax.nn.log_softmax(logits, axis=-1)


def init_params(key):
    ks = jax.random.split(key, 8)
    scale = 0.2
    return {
        "w_fc":   scale * jax.random.normal(ks[0], (P, IN_SIZE, HD), jnp.float32),
        "attn_l": scale * jax.random.normal(ks[1], (P, HEADS, HIDDEN), jnp.float32),
        "attn_r": scale * jax.random.normal(ks[2], (P, HEADS, HIDDEN), jnp.float32),
        "sem_w1": scale * jax.random.normal(ks[3], (HD, SEM_HIDDEN), jnp.float32),
        "sem_b1": jnp.zeros((1, SEM_HIDDEN), jnp.float32),
        "sem_w2": scale * jax.random.normal(ks[4], (SEM_HIDDEN, 1), jnp.float32),
        "sem_b2": jnp.zeros((1, 1), jnp.float32),
        "pred_w": scale * jax.random.normal(ks[5], (HD, OUT_SIZE), jnp.float32),
        "pred_b": 0.05 * jax.random.normal(ks[6], (1, OUT_SIZE), jnp.float32),
    }


if __name__ == "__main__":
    key = jax.random.PRNGKey(0)
    kp, ka, kx = jax.random.split(key, 3)

    params = init_params(kp)
    packed = pack_params(params)   # layout packing done once, outside the jitted forward

    # random sparse graphs per meta-path, with self-loops (avoids isolated nodes)
    rand_adj = (jax.random.uniform(ka, (P, N, N)) < 0.3).astype(jnp.float32)
    eye = jnp.eye(N, dtype=jnp.float32)[None, :, :]
    adj = jnp.clip(rand_adj + eye, 0.0, 1.0)

    x = jax.random.normal(kx, (N, IN_SIZE), jnp.float32)   # node features h

    out = jax.jit(hgan_forward)(adj, x, packed)
    out = jax.block_until_ready(out)

    ref = reference_forward(adj, x, params)
    assert out.shape == (N, OUT_SIZE)
    # slightly looser tolerance: softmax denominators use the EUP approx reciprocal
    assert jnp.allclose(out, ref, atol=2e-3, rtol=2e-3), "Pallas output mismatch vs reference"

    print("KERNEL_OK")
</pallas_src>

<mosaic_0001>
module attributes {stable_mosaic.version = 11 : i64} {
  func.func @_hgan_kernel(%arg0: memref<2x16x16xf32, #tpu.memory_space<vmem>>, %arg1: memref<16x8xf32, #tpu.memory_space<vmem>>, %arg2: memref<8x32xf32, #tpu.memory_space<vmem>>, %arg3: memref<32x4xf32, #tpu.memory_space<vmem>>, %arg4: memref<32x4xf32, #tpu.memory_space<vmem>>, %arg5: memref<16x128xf32, #tpu.memory_space<vmem>>, %arg6: memref<1x128xf32, #tpu.memory_space<vmem>>, %arg7: memref<128x1xf32, #tpu.memory_space<vmem>>, %arg8: memref<1x1xf32, #tpu.memory_space<vmem>>, %arg9: memref<16x128xf32, #tpu.memory_space<vmem>>, %arg10: memref<1x128xf32, #tpu.memory_space<vmem>>, %arg11: memref<16x128xf32, #tpu.memory_space<vmem>>, %arg12: memref<32x16xf32, #tpu.memory_space<vmem>>) attributes {dimension_semantics = [], scalar_prefetch = 0 : i64, scratch_operands = 1 : i64, tpu.core_type = #tpu.core_type<tc>} {
    %c0 = arith.constant 0 : index
    %c0_0 = arith.constant 0 : index
    %0 = vector.load %arg1[%c0, %c0_0] : memref<16x8xf32, #tpu.memory_space<vmem>>, vector<16x8xf32>
    %c0_1 = arith.constant 0 : index
    %c0_2 = arith.constant 0 : index
    %1 = vector.load %arg2[%c0_1, %c0_2] : memref<8x32xf32, #tpu.memory_space<vmem>>, vector<8x32xf32>
    %cst = arith.constant dense<0.000000e+00> : vector<16x32xf32>
    %2 = tpu.matmul %0, %1, %cst {dimension_numbers = #tpu.dot_dimension_numbers<[1], [0], [0], [1], [0, 0, 1, 1], [], []>} : vector<16x8xf32>, vector<8x32xf32>, vector<16x32xf32> -> vector<16x32xf32>
    %c0_3 = arith.constant 0 : index
    %c0_4 = arith.constant 0 : index
    %3 = vector.load %arg3[%c0_3, %c0_4] : memref<32x4xf32, #tpu.memory_space<vmem>>, vector<32x4xf32>
    %cst_5 = arith.constant dense<0.000000e+00> : vector<16x4xf32>
    %4 = tpu.matmul %2, %3, %cst_5 {dimension_numbers = #tpu.dot_dimension_numbers<[1], [0], [0], [1], [0, 0, 1, 1], [], []>} : vector<16x32xf32>, vector<32x4xf32>, vector<16x4xf32> -> vector<16x4xf32>
    %c0_6 = arith.constant 0 : index
    %c0_7 = arith.constant 0 : index
    %5 = vector.load %arg4[%c0_6, %c0_7] : memref<32x4xf32, #tpu.memory_space<vmem>>, vector<32x4xf32>
    %cst_8 = arith.constant dense<0.000000e+00> : vector<16x4xf32>
    %6 = tpu.matmul %2, %5, %cst_8 {dimension_numbers = #tpu.dot_dimension_numbers<[1], [0], [0], [1], [0, 0, 1, 1], [], []>} : vector<16x32xf32>, vector<32x4xf32>, vector<16x4xf32> -> vector<16x4xf32>
    %7 = tpu.transpose %4, [1, 0] : vector<16x4xf32> -> vector<4x16xf32>
    %c0_9 = arith.constant 0 : index
    %c0_10 = arith.constant 0 : index
    %c0_11 = arith.constant 0 : index
    %8 = vector.load %arg0[%c0_9, %c0_10, %c0_11] : memref<2x16x16xf32, #tpu.memory_space<vmem>>, vector<1x16x16xf32>
    %9 = vector.shape_cast %8 : vector<1x16x16xf32> to vector<16x16xf32>
    %cst_12 = arith.constant 0.000000e+00 : f32
    %10 = vector.broadcast %cst_12 : f32 to vector<16x16xf32>
    %11 = arith.cmpf ogt, %9, %10 : vector<16x16xf32>
    %12 = vector.extract_strided_slice %6 {offsets = [0, 0], sizes = [16, 1], strides = [1, 1]} : vector<16x4xf32> to vector<16x1xf32>
    %13 = vector.extract_strided_slice %7 {offsets = [0, 0], sizes = [1, 16], strides = [1, 1]} : vector<4x16xf32> to vector<1x16xf32>
    %14 = vector.broadcast %12 : vector<16x1xf32> to vector<16x16xf32>
    %15 = vector.broadcast %13 : vector<1x16xf32> to vector<16x16xf32>
    %16 = arith.addf %14, %15 : vector<16x16xf32>
    %cst_13 = arith.constant 0.000000e+00 : f32
    %17 = vector.broadcast %cst_13 : f32 to vector<16x16xf32>
    %18 = arith.cmpf oge, %16, %17 : vector<16x16xf32>
    %cst_14 = arith.constant 2.000000e-01 : f32
    %19 = vector.broadcast %cst_14 : f32 to vector<16x16xf32>
    %20 = arith.mulf %19, %16 : vector<16x16xf32>
    %21 = arith.select %18, %16, %20 : vector<16x16xi1>, vector<16x16xf32>
    %cst_15 = arith.constant -1.000000e+30 : f32
    %22 = vector.broadcast %cst_15 : f32 to vector<16x16xf32>
    %23 = arith.select %11, %21, %22 : vector<16x16xi1>, vector<16x16xf32>
    %cst_16 = arith.constant dense<0xFF800000> : vector<16xf32>
    %24 = vector.multi_reduction <maximumf>, %23, %cst_16 [1] : vector<16x16xf32> to vector<16xf32>
    %25 = vector.shape_cast %24 : vector<16xf32> to vector<16x1xf32>
    %26 = vector.broadcast %25 : vector<16x1xf32> to vector<16x16xf32>
    %27 = arith.subf %23, %26 : vector<16x16xf32>
    %28 = math.exp %27 : vector<16x16xf32>
    %cst_17 = arith.constant dense<0.000000e+00> : vector<16xf32>
    %29 = vector.multi_reduction <add>, %28, %cst_17 [1] : vector<16x16xf32> to vector<16xf32>
    %30 = vector.shape_cast %29 : vector<16xf32> to vector<16x1xf32>
    %31 = tpu.reciprocal %30 {approx = true} : vector<16x1xf32> -> vector<16x1xf32>
    %32 = vector.extract_strided_slice %2 {offsets = [0, 0], sizes = [16, 8], strides = [1, 1]} : vector<16x32xf32> to vector<16x8xf32>
    %cst_18 = arith.constant dense<0.000000e+00> : vector<16x8xf32>
    %33 = tpu.matmul %28, %32, %cst_18 {dimension_numbers = #tpu.dot_dimension_numbers<[1], [0], [0], [1], [0, 0, 1, 1], [], []>} : vector<16x16xf32>, vector<16x8xf32>, vector<16x8xf32> -> vector<16x8xf32>
    %34 = vector.broadcast %31 : vector<16x1xf32> to vector<16x8xf32>
    %35 = arith.mulf %33, %34 : vector<16x8xf32>
    %cst_19 = arith.constant 0.000000e+00 : f32
    %36 = vector.broadcast %cst_19 : f32 to vector<16x8xf32>
    %37 = arith.cmpf ogt, %35, %36 : vector<16x8xf32>
    %cst_20 = arith.constant 0.000000e+00 : f32
    %38 = vector.broadcast %cst_20 : f32 to vector<16x8xf32>
    %39 = arith.minimumf %35, %38 : vector<16x8xf32>
    %40 = math.exp %39 : vector<16x8xf32>
    %cst_21 = arith.constant 1.000000e+00 : f32
    %41 = vector.broadcast %cst_21 : f32 to vector<16x8xf32>
    %42 = arith.subf %40, %41 : vector<16x8xf32>
    %43 = arith.select %37, %35, %42 : vector<16x8xi1>, vector<16x8xf32>
    %c0_22 = arith.constant 0 : index
    %c0_23 = arith.constant 0 : index
    %44 = vector.load %arg12[%c0_22, %c0_23] : memref<32x16xf32, #tpu.memory_space<vmem>>, vector<16x8xf32>
    tpu.vector_store %arg12[%c0_22, %c0_23], %43 {strides = array<i32>} : memref<32x16xf32, #tpu.memory_space<vmem>>, vector<16x8xf32>,
    %45 = vector.extract_strided_slice %6 {offsets = [0, 1], sizes = [16, 1], strides = [1, 1]} : vector<16x4xf32> to vector<16x1xf32>
    %46 = vector.extract_strided_slice %7 {offsets = [1, 0], sizes = [1, 16], strides = [1, 1]} : vector<4x16xf32> to vector<1x16xf32>
    %47 = vector.broadcast %45 : vector<16x1xf32> to vector<16x16xf32>
    %48 = vector.broadcast %46 : vector<1x16xf32> to vector<16x16xf32>
    %49 = arith.addf %47, %48 : vector<16x16xf32>
    %cst_24 = arith.constant 0.000000e+00 : f32
    %50 = vector.broadcast %cst_24 : f32 to vector<16x16xf32>
    %51 = arith.cmpf oge, %49, %50 : vector<16x16xf32>
    %cst_25 = arith.constant 2.000000e-01 : f32
    %52 = vector.broadcast %cst_25 : f32 to vector<16x16xf32>
    %53 = arith.mulf %52, %49 : vector<16x16xf32>
    %54 = arith.select %51, %49, %53 : vector<16x16xi1>, vector<16x16xf32>
    %cst_26 = arith.constant -1.000000e+30 : f32
    %55 = vector.broadcast %cst_26 : f32 to vector<16x16xf32>
    %56 = arith.select %11, %54, %55 : vector<16x16xi1>, vector<16x16xf32>
    %cst_27 = arith.constant dense<0xFF800000> : vector<16xf32>
    %57 = vector.multi_reduction <maximumf>, %56, %cst_27 [1] : vector<16x16xf32> to vector<16xf32>
    %58 = vector.shape_cast %57 : vector<16xf32> to vector<16x1xf32>
    %59 = vector.broadcast %58 : vector<16x1xf32> to vector<16x16xf32>
    %60 = arith.subf %56, %59 : vector<16x16xf32>
    %61 = math.exp %60 : vector<16x16xf32>
    %cst_28 = arith.constant dense<0.000000e+00> : vector<16xf32>
    %62 = vector.multi_reduction <add>, %61, %cst_28 [1] : vector<16x16xf32> to vector<16xf32>
    %63 = vector.shape_cast %62 : vector<16xf32> to vector<16x1xf32>
    %64 = tpu.reciprocal %63 {approx = true} : vector<16x1xf32> -> vector<16x1xf32>
    %65 = vector.extract_strided_slice %2 {offsets = [0, 8], sizes = [16, 8], strides = [1, 1]} : vector<16x32xf32> to vector<16x8xf32>
    %cst_29 = arith.constant dense<0.000000e+00> : vector<16x8xf32>
    %66 = tpu.matmul %61, %65, %cst_29 {dimension_numbers = #tpu.dot_dimension_numbers<[1], [0], [0], [1], [0, 0, 1, 1], [], []>} : vector<16x16xf32>, vector<16x8xf32>, vector<16x8xf32> -> vector<16x8xf32>
    %67 = vector.broadcast %64 : vector<16x1xf32> to vector<16x8xf32>
    %68 = arith.mulf %66, %67 : vector<16x8xf32>
    %cst_30 = arith.constant 0.000000e+00 : f32
    %69 = vector.broadcast %cst_30 : f32 to vector<16x8xf32>
    %70 = arith.cmpf ogt, %68, %69 : vector<16x8xf32>
    %cst_31 = arith.constant 0.000000e+00 : f32
    %71 = vector.broadcast %cst_31 : f32 to vector<16x8xf32>
    %72 = arith.minimumf %68, %71 : vector<16x8xf32>
    %73 = math.exp %72 : vector<16x8xf32>
    %cst_32 = arith.constant 1.000000e+00 : f32
    %74 = vector.broadcast %cst_32 : f32 to vector<16x8xf32>
    %75 = arith.subf %73, %74 : vector<16x8xf32>
    %76 = arith.select %70, %68, %75 : vector<16x8xi1>, vector<16x8xf32>
    %c0_33 = arith.constant 0 : index
    %c8 = arith.constant 8 : index
    %77 = vector.load %arg12[%c0_33, %c8] : memref<32x16xf32, #tpu.memory_space<vmem>>, vector<16x8xf32>
    tpu.vector_store %arg12[%c0_33, %c8], %76 {strides = array<i32>} : memref<32x16xf32, #tpu.memory_space<vmem>>, vector<16x8xf32>,
    %c1 = arith.constant 1 : index
    %c0_34 = arith.constant 0 : index
    %c0_35 = arith.constant 0 : index
    %78 = vector.load %arg0[%c1, %c0_34, %c0_35] : memref<2x16x16xf32, #tpu.memory_space<vmem>>, vector<1x16x16xf32>
    %79 = vector.shape_cast %78 : vector<1x16x16xf32> to vector<16x16xf32>
    %cst_36 = arith.constant 0.000000e+00 : f32
    %80 = vector.broadcast %cst_36 : f32 to vector<16x16xf32>
    %81 = arith.cmpf ogt, %79, %80 : vector<16x16xf32>
    %82 = vector.extract_strided_slice %6 {offsets = [0, 2], sizes = [16, 1], strides = [1, 1]} : vector<16x4xf32> to vector<16x1xf32>
    %83 = vector.extract_strided_slice %7 {offsets = [2, 0], sizes = [1, 16], strides = [1, 1]} : vector<4x16xf32> to vector<1x16xf32>
    %84 = vector.broadcast %82 : vector<16x1xf32> to vector<16x16xf32>
    %85 = vector.broadcast %83 : vector<1x16xf32> to vector<16x16xf32>
    %86 = arith.addf %84, %85 : vector<16x16xf32>
    %cst_37 = arith.constant 0.000000e+00 : f32
    %87 = vector.broadcast %cst_37 : f32 to vector<16x16xf32>
    %88 = arith.cmpf oge, %86, %87 : vector<16x16xf32>
    %cst_38 = arith.constant 2.000000e-01 : f32
    %89 = vector.broadcast %cst_38 : f32 to vector<16x16xf32>
    %90 = arith.mulf %89, %86 : vector<16x16xf32>
    %91 = arith.select %88, %86, %90 : vector<16x16xi1>, vector<16x16xf32>
    %cst_39 = arith.constant -1.000000e+30 : f32
    %92 = vector.broadcast %cst_39 : f32 to vector<16x16xf32>
    %93 = arith.select %81, %91, %92 : vector<16x16xi1>, vector<16x16xf32>
    %cst_40 = arith.constant dense<0xFF800000> : vector<16xf32>
    %94 = vector.multi_reduction <maximumf>, %93, %cst_40 [1] : vector<16x16xf32> to vector<16xf32>
    %95 = vector.shape_cast %94 : vector<16xf32> to vector<16x1xf32>
    %96 = vector.broadcast %95 : vector<16x1xf32> to vector<16x16xf32>
    %97 = arith.subf %93, %96 : vector<16x16xf32>
    %98 = math.exp %97 : vector<16x16xf32>
    %cst_41 = arith.constant dense<0.000000e+00> : vector<16xf32>
    %99 = vector.multi_reduction <add>, %98, %cst_41 [1] : vector<16x16xf32> to vector<16xf32>
    %100 = vector.shape_cast %99 : vector<16xf32> to vector<16x1xf32>
    %101 = tpu.reciprocal %100 {approx = true} : vector<16x1xf32> -> vector<16x1xf32>
    %102 = vector.extract_strided_slice %2 {offsets = [0, 16], sizes = [16, 8], strides = [1, 1]} : vector<16x32xf32> to vector<16x8xf32>
    %cst_42 = arith.constant dense<0.000000e+00> : vector<16x8xf32>
    %103 = tpu.matmul %98, %102, %cst_42 {dimension_numbers = #tpu.dot_dimension_numbers<[1], [0], [0], [1], [0, 0, 1, 1], [], []>} : vector<16x16xf32>, vector<16x8xf32>, vector<16x8xf32> -> vector<16x8xf32>
    %104 = vector.broadcast %101 : vector<16x1xf32> to vector<16x8xf32>
    %105 = arith.mulf %103, %104 : vector<16x8xf32>
    %cst_43 = arith.constant 0.000000e+00 : f32
    %106 = vector.broadcast %cst_43 : f32 to vector<16x8xf32>
    %107 = arith.cmpf ogt, %105, %106 : vector<16x8xf32>
    %cst_44 = arith.constant 0.000000e+00 : f32
    %108 = vector.broadcast %cst_44 : f32 to vector<16x8xf32>
    %109 = arith.minimumf %105, %108 : vector<16x8xf32>
    %110 = math.exp %109 : vector<16x8xf32>
    %cst_45 = arith.constant 1.000000e+00 : f32
    %111 = vector.broadcast %cst_45 : f32 to vector<16x8xf32>
    %112 = arith.subf %110, %111 : vector<16x8xf32>
    %113 = arith.select %107, %105, %112 : vector<16x8xi1>, vector<16x8xf32>
    %c16 = arith.constant 16 : index
    %c0_46 = arith.constant 0 : index
    %114 = vector.load %arg12[%c16, %c0_46] : memref<32x16xf32, #tpu.memory_space<vmem>>, vector<16x8xf32>
    tpu.vector_store %arg12[%c16, %c0_46], %113 {strides = array<i32>} : memref<32x16xf32, #tpu.memory_space<vmem>>, vector<16x8xf32>,
    %115 = vector.extract_strided_slice %6 {offsets = [0, 3], sizes = [16, 1], strides = [1, 1]} : vector<16x4xf32> to vector<16x1xf32>
    %116 = vector.extract_strided_slice %7 {offsets = [3, 0], sizes = [1, 16], strides = [1, 1]} : vector<4x16xf32> to vector<1x16xf32>
    %117 = vector.broadcast %115 : vector<16x1xf32> to vector<16x16xf32>
    %118 = vector.broadcast %116 : vector<1x16xf32> to vector<16x16xf32>
    %119 = arith.addf %117, %118 : vector<16x16xf32>
    %cst_47 = arith.constant 0.000000e+00 : f32
    %120 = vector.broadcast %cst_47 : f32 to vector<16x16xf32>
    %121 = arith.cmpf oge, %119, %120 : vector<16x16xf32>
    %cst_48 = arith.constant 2.000000e-01 : f32
    %122 = vector.broadcast %cst_48 : f32 to vector<16x16xf32>
    %123 = arith.mulf %122, %119 : vector<16x16xf32>
    %124 = arith.select %121, %119, %123 : vector<16x16xi1>, vector<16x16xf32>
    %cst_49 = arith.constant -1.000000e+30 : f32
    %125 = vector.broadcast %cst_49 : f32 to vector<16x16xf32>
    %126 = arith.select %81, %124, %125 : vector<16x16xi1>, vector<16x16xf32>
    %cst_50 = arith.constant dense<0xFF800000> : vector<16xf32>
    %127 = vector.multi_reduction <maximumf>, %126, %cst_50 [1] : vector<16x16xf32> to vector<16xf32>
    %128 = vector.shape_cast %127 : vector<16xf32> to vector<16x1xf32>
    %129 = vector.broadcast %128 : vector<16x1xf32> to vector<16x16xf32>
    %130 = arith.subf %126, %129 : vector<16x16xf32>
    %131 = math.exp %130 : vector<16x16xf32>
    %cst_51 = arith.constant dense<0.000000e+00> : vector<16xf32>
    %132 = vector.multi_reduction <add>, %131, %cst_51 [1] : vector<16x16xf32> to vector<16xf32>
    %133 = vector.shape_cast %132 : vector<16xf32> to vector<16x1xf32>
    %134 = tpu.reciprocal %133 {approx = true} : vector<16x1xf32> -> vector<16x1xf32>
    %135 = vector.extract_strided_slice %2 {offsets = [0, 24], sizes = [16, 8], strides = [1, 1]} : vector<16x32xf32> to vector<16x8xf32>
    %cst_52 = arith.constant dense<0.000000e+00> : vector<16x8xf32>
    %136 = tpu.matmul %131, %135, %cst_52 {dimension_numbers = #tpu.dot_dimension_numbers<[1], [0], [0], [1], [0, 0, 1, 1], [], []>} : vector<16x16xf32>, vector<16x8xf32>, vector<16x8xf32> -> vector<16x8xf32>
    %137 = vector.broadcast %134 : vector<16x1xf32> to vector<16x8xf32>
    %138 = arith.mulf %136, %137 : vector<16x8xf32>
    %cst_53 = arith.constant 0.000000e+00 : f32
    %139 = vector.broadcast %cst_53 : f32 to vector<16x8xf32>
    %140 = arith.cmpf ogt, %138, %139 : vector<16x8xf32>
    %cst_54 = arith.constant 0.000000e+00 : f32
    %141 = vector.broadcast %cst_54 : f32 to vector<16x8xf32>
    %142 = arith.minimumf %138, %141 : vector<16x8xf32>
    %143 = math.exp %142 : vector<16x8xf32>
    %cst_55 = arith.constant 1.000000e+00 : f32
    %144 = vector.broadcast %cst_55 : f32 to vector<16x8xf32>
    %145 = arith.subf %143, %144 : vector<16x8xf32>
    %146 = arith.select %140, %138, %145 : vector<16x8xi1>, vector<16x8xf32>
    %c16_56 = arith.constant 16 : index
    %c8_57 = arith.constant 8 : index
    %147 = vector.load %arg12[%c16_56, %c8_57] : memref<32x16xf32, #tpu.memory_space<vmem>>, vector<16x8xf32>
    tpu.vector_store %arg12[%c16_56, %c8_57], %146 {strides = array<i32>} : memref<32x16xf32, #tpu.memory_space<vmem>>, vector<16x8xf32>,
    %c0_58 = arith.constant 0 : index
    %c0_59 = arith.constant 0 : index
    %148 = vector.load %arg12[%c0_58, %c0_59] : memref<32x16xf32, #tpu.memory_space<vmem>>, vector<32x16xf32>
    %c0_60 = arith.constant 0 : index
    %c0_61 = arith.constant 0 : index
    %149 = vector.load %arg5[%c0_60, %c0_61] : memref<16x128xf32, #tpu.memory_space<vmem>>, vector<16x128xf32>
    %cst_62 = arith.constant dense<0.000000e+00> : vector<32x128xf32>
    %150 = tpu.matmul %148, %149, %cst_62 {dimension_numbers = #tpu.dot_dimension_numbers<[1], [0], [0], [1], [0, 0, 1, 1], [], []>} : vector<32x16xf32>, vector<16x128xf32>, vector<32x128xf32> -> vector<32x128xf32>
    %c0_63 = arith.constant 0 : index
    %c0_64 = arith.constant 0 : index
    %151 = vector.load %arg6[%c0_63, %c0_64] : memref<1x128xf32, #tpu.memory_space<vmem>>, vector<1x128xf32>
    %152 = vector.broadcast %151 : vector<1x128xf32> to vector<32x128xf32>
    %153 = arith.addf %150, %152 : vector<32x128xf32>
    %154 = math.tanh %153 : vector<32x128xf32>
    %c0_65 = arith.constant 0 : index
    %c0_66 = arith.constant 0 : index
    %155 = vector.load %arg7[%c0_65, %c0_66] : memref<128x1xf32, #tpu.memory_space<vmem>>, vector<128x1xf32>
    %cst_67 = arith.constant dense<0.000000e+00> : vector<32x1xf32>
    %156 = tpu.matmul %154, %155, %cst_67 {dimension_numbers = #tpu.dot_dimension_numbers<[1], [0], [0], [1], [0, 0, 1, 1], [], []>} : vector<32x128xf32>, vector<128x1xf32>, vector<32x1xf32> -> vector<32x1xf32>
    %c0_68 = arith.constant 0 : index
    %c0_69 = arith.constant 0 : index
    %157 = vector.load %arg8[%c0_68, %c0_69] : memref<1x1xf32, #tpu.memory_space<vmem>>, vector<1x1xf32>
    %158 = vector.broadcast %157 : vector<1x1xf32> to vector<32x1xf32>
    %159 = arith.addf %156, %158 : vector<32x1xf32>
    %160 = vector.extract_strided_slice %159 {offsets = [0, 0], sizes = [16, 1], strides = [1, 1]} : vector<32x1xf32> to vector<16x1xf32>
    %161 = vector.extract_strided_slice %159 {offsets = [16, 0], sizes = [16, 1], strides = [1, 1]} : vector<32x1xf32> to vector<16x1xf32>
    %162 = arith.maximumf %160, %161 : vector<16x1xf32>
    %163 = arith.subf %160, %162 : vector<16x1xf32>
    %164 = math.exp %163 : vector<16x1xf32>
    %165 = arith.subf %161, %162 : vector<16x1xf32>
    %166 = math.exp %165 : vector<16x1xf32>
    %167 = arith.addf %164, %166 : vector<16x1xf32>
    %168 = tpu.reciprocal %167 {approx = true} : vector<16x1xf32> -> vector<16x1xf32>
    %169 = arith.mulf %164, %168 : vector<16x1xf32>
    %c0_70 = arith.constant 0 : index
    %c0_71 = arith.constant 0 : index
    %170 = vector.load %arg12[%c0_70, %c0_71] : memref<32x16xf32, #tpu.memory_space<vmem>>, vector<16x16xf32>
    %171 = vector.broadcast %169 : vector<16x1xf32> to vector<16x16xf32>
    %172 = arith.mulf %171, %170 : vector<16x16xf32>
    %173 = arith.mulf %166, %168 : vector<16x1xf32>
    %c16_72 = arith.constant 16 : index
    %c0_73 = arith.constant 0 : index
    %174 = vector.load %arg12[%c16_72, %c0_73] : memref<32x16xf32, #tpu.memory_space<vmem>>, vector<16x16xf32>
    %175 = vector.broadcast %173 : vector<16x1xf32> to vector<16x16xf32>
    %176 = arith.mulf %175, %174 : vector<16x16xf32>
    %177 = arith.addf %172, %176 : vector<16x16xf32>
    %c0_74 = arith.constant 0 : index
    %c0_75 = arith.constant 0 : index
    %178 = vector.load %arg9[%c0_74, %c0_75] : memref<16x128xf32, #tpu.memory_space<vmem>>, vector<16x128xf32>
    %cst_76 = arith.constant dense<0.000000e+00> : vector<16x128xf32>
    %179 = tpu.matmul %177, %178, %cst_76 {dimension_numbers = #tpu.dot_dimension_numbers<[1], [0], [0], [1], [0, 0, 1, 1], [], []>} : vector<16x16xf32>, vector<16x128xf32>, vector<16x128xf32> -> vector<16x128xf32>
    %c0_77 = arith.constant 0 : index
    %c0_78 = arith.constant 0 : index
    %180 = vector.load %arg10[%c0_77, %c0_78] : memref<1x128xf32, #tpu.memory_space<vmem>>, vector<1x128xf32>
    %181 = vector.broadcast %180 : vector<1x128xf32> to vector<16x128xf32>
    %182 = arith.addf %179, %181 : vector<16x128xf32>
    %cst_79 = arith.constant dense<0xFF800000> : vector<16xf32>
    %183 = vector.multi_reduction <maximumf>, %182, %cst_79 [1] : vector<16x128xf32> to vector<16xf32>
    %184 = vector.shape_cast %183 : vector<16xf32> to vector<16x1xf32>
    %185 = vector.broadcast %184 : vector<16x1xf32> to vector<16x128xf32>
    %186 = arith.subf %182, %185 : vector<16x128xf32>
    %187 = math.exp %186 : vector<16x128xf32>
    %cst_80 = arith.constant dense<0.000000e+00> : vector<16xf32>
    %188 = vector.multi_reduction <add>, %187, %cst_80 [1] : vector<16x128xf32> to vector<16xf32>
    %189 = vector.shape_cast %188 : vector<16xf32> to vector<16x1xf32>
    %190 = math.log %189 : vector<16x1xf32>
    %191 = arith.addf %190, %184 : vector<16x1xf32>
    %192 = vector.broadcast %191 : vector<16x1xf32> to vector<16x128xf32>
    %193 = arith.subf %182, %192 : vector<16x128xf32>
    %c0_81 = arith.constant 0 : index
    %c0_82 = arith.constant 0 : index
    %194 = vector.load %arg11[%c0_81, %c0_82] : memref<16x128xf32, #tpu.memory_space<vmem>>, vector<16x128xf32>
    tpu.vector_store %arg11[%c0_81, %c0_82], %193 {strides = array<i32>} : memref<16x128xf32, #tpu.memory_space<vmem>>, vector<16x128xf32>,
    return
  }
}

</mosaic_0001>

<llo_original>
// kernel: hgan_forward.1
$region0: #{hgan_forward.1}
  #allocation0 [shape = 'u32[]', space=smem, size = 0x4, offset = 0x4, fixed_abs, tag = 'smem constant byte address 0x4 - core index']
  #allocation1 [shape = 'u32[144,128]{1,0:T(1,128)}', space=vmem, size = 0x12000, scoped, tag = 'internal scratch']
  #allocation2 [shape = 'f32[32,16]{1,0:T(8,128)}', space=vmem, size = 0x4000, scoped, tag = 'scratch operand']
  #allocation3 [shape = 'f32[1,1]{1,0:T(1,128)S(1)}', space=vmem, size = 0x200, scoped, tag = 'scoped memory for hgan_forward.1']
  %s0 = inlined_call_operand.vmem [shape: f32[2,16,16], index: 0, kind: input, shape index: {}]
  %s1 = inlined_call_operand.vmem [shape: f32[16,8], index: 1, kind: input, shape index: {}]
  %s2 = inlined_call_operand.vmem [shape: f32[8,32], index: 2, kind: input, shape index: {}]
  %s3 = inlined_call_operand.vmem [shape: f32[32,4], index: 3, kind: input, shape index: {}]
  %s4 = inlined_call_operand.vmem [shape: f32[32,4], index: 4, kind: input, shape index: {}]
  %s5 = inlined_call_operand.vmem [shape: f32[16,128], index: 5, kind: input, shape index: {}]
  %s6 = inlined_call_operand.vmem [shape: f32[1,128], index: 6, kind: input, shape index: {}]
  %s7 = inlined_call_operand.vmem [shape: f32[128,1], index: 7, kind: input, shape index: {}]
  %s8 = inlined_call_operand.<no memory space> [shape: f32[1,1], index: 8, kind: input, shape index: {}]
  %s9 = inlined_call_operand.vmem [shape: f32[16,128], index: 9, kind: input, shape index: {}]
  %s10 = inlined_call_operand.vmem [shape: f32[1,128], index: 10, kind: input, shape index: {}]
  %s11 = inlined_call_operand.vmem [shape: f32[16,128], index: 11, kind: output, shape index: {}]
  %s12 = sld [smem:[#allocation0]]
  $region54: #{hgan_forward.1} parent=0
    _
  %s14 = ssub.s32 1, %s12
  %s15 = scalar_select 0, %s14, %s12
  %v16 = vstv %s8
  %17 = vst [vmem:[#allocation3] sm:$0x1] %v16
  // Predicated region
  $region2: #{hgan_forward.1} parent=0 // pred_check
    _
  $region3: #{hgan_forward.1} parent=0 // pred_check_branch
    %19 = sbr.rel (0) target = $region5
  $region4: #{hgan_forward.1} parent=0 // pred_region
    _
  $region5: #{hgan_forward.1} parent=0 // pred_fallthru
    _
  // Predicated region
  $region6: #{hgan_forward.1} parent=0 // pred_check
    _
  $region7: #{hgan_forward.1} parent=0 // pred_check_branch
    %21 = sbr.rel (0) target = $region9
  $region8: #{hgan_forward.1} parent=0 // pred_region
    _
  $region9: #{hgan_forward.1} parent=0 // pred_fallthru
    _
  // Predicated region
  $region10: #{hgan_forward.1} parent=0 // pred_check
    _
  $region11: #{hgan_forward.1} parent=0 // pred_check_branch
    %23 = sbr.rel (0) target = $region13
  $region12: #{hgan_forward.1} parent=0 // pred_region
    _
  $region13: #{hgan_forward.1} parent=0 // pred_fallthru
    _
  // Predicated region
  $region14: #{hgan_forward.1} parent=0 // pred_check
    _
  $region15: #{hgan_forward.1} parent=0 // pred_check_branch
    %25 = sbr.rel (0) target = $region17
  $region16: #{hgan_forward.1} parent=0 // pred_region
    _
  $region17: #{hgan_forward.1} parent=0 // pred_fallthru
    _
  // Predicated region
  $region18: #{hgan_forward.1} parent=0 // pred_check
    _
  $region19: #{hgan_forward.1} parent=0 // pred_check_branch
    %27 = sbr.rel (0) target = $region21
  $region20: #{hgan_forward.1} parent=0 // pred_region
    _
  $region21: #{hgan_forward.1} parent=0 // pred_fallthru
    _
  // Predicated region
  $region22: #{hgan_forward.1} parent=0 // pred_check
    _
  $region23: #{hgan_forward.1} parent=0 // pred_check_branch
    %29 = sbr.rel (0) target = $region25
  $region24: #{hgan_forward.1} parent=0 // pred_region
    _
  $region25: #{hgan_forward.1} parent=0 // pred_fallthru
    _
  // Predicated region
  $region26: #{hgan_forward.1} parent=0 // pred_check
    _
  $region27: #{hgan_forward.1} parent=0 // pred_check_branch
    %31 = sbr.rel (0) target = $region29
  $region28: #{hgan_forward.1} parent=0 // pred_region
    _
  $region29: #{hgan_forward.1} parent=0 // pred_fallthru
    _
  // Predicated region
  $region30: #{hgan_forward.1} parent=0 // pred_check
    _
  $region31: #{hgan_forward.1} parent=0 // pred_check_branch
    %33 = sbr.rel (0) target = $region33
  $region32: #{hgan_forward.1} parent=0 // pred_region
    _
  $region33: #{hgan_forward.1} parent=0 // pred_fallthru
    _
  // Predicated region
  $region34: #{hgan_forward.1} parent=0 // pred_check
    _
  $region35: #{hgan_forward.1} parent=0 // pred_check_branch
    %35 = sbr.rel (0) target = $region37
  $region36: #{hgan_forward.1} parent=0 // pred_region
    _
  $region37: #{hgan_forward.1} parent=0 // pred_fallthru
    _
  // Predicated region
  $region38: #{hgan_forward.1} parent=0 // pred_check
    _
  $region39: #{hgan_forward.1} parent=0 // pred_check_branch
    %37 = sbr.rel (0) target = $region41
  $region40: #{hgan_forward.1} parent=0 // pred_region
    _
  $region41: #{hgan_forward.1} parent=0 // pred_fallthru
    _
  // Predicated region
  $region42: #{hgan_forward.1} parent=0 // pred_check
    _
  $region43: #{hgan_forward.1} parent=0 // pred_check_branch
    %39 = sbr.rel (0) target = $region45
  $region44: #{hgan_forward.1} parent=0 // pred_region
    _
  $region45: #{hgan_forward.1} parent=0 // pred_fallthru
    _
  %v40 = vld [vmem:[%s1] sm:$0xff]
  %v41 = vld [vmem:[%s1 + $0x8] sm:$0xff]
  %v42 = vld [vmem:[%s2] sm:$0xff]
  %vm43 = vcmask 64512
  %v45 = vsel %vm43, %v40, 0
  %v48 = vsel %vm43, %v41, 0
  %50 = vmatprep.subr.mxu0 0.0
  %51 = vmatpush1.msra.mxu0 %v42
  %52 = vmatprep.subr.mxu0 0.0
  %53 = vmatpush1.msra.mxu0 0.0
  %54 = vmatprep.subr.mxu0 0.0
  %55 = vmatpush1.msra.mxu0 0.0
  %56 = vmatprep.subr.mxu0 0.0
  %57 = vmatpush1.msra.mxu0 0.0
  %58 = vmatprep.subr.mxu0 0.0
  %59 = vmatpush1.msra.mxu0 0.0
  %60 = vmatprep.subr.mxu0 0.0
  %61 = vmatpush1.msra.mxu0 0.0
  %62 = vmatprep.subr.mxu0 0.0
  %63 = vmatpush1.msra.mxu0 0.0
  %64 = vmatprep.subr.mxu0 0.0
  %65 = vmatpush1.msra.mxu0 0.0
  %66 = vmatprep.subr.mxu0 0.0
  %67 = vmatpush1.msra.mxu0 0.0
  %68 = vmatprep.subr.mxu0 0.0
  %69 = vmatpush1.msra.mxu0 0.0
  %70 = vmatprep.subr.mxu0 0.0
  %71 = vmatpush1.msra.mxu0 0.0
  %72 = vmatprep.subr.mxu0 0.0
  %73 = vmatpush1.msra.mxu0 0.0
  %74 = vmatprep.subr.mxu0 0.0
  %75 = vmatpush1.msra.mxu0 0.0
  %76 = vmatprep.subr.mxu0 0.0
  %77 = vmatpush1.msra.mxu0 0.0
  %78 = vmatprep.subr.mxu0 0.0
  %79 = vmatpush1.msra.mxu0 0.0
  %80 = vmatprep.subr.mxu0 0.0
  %81 = vmatpush1.msra.mxu0 0.0
  %82 = vmatprep.subr.mxu0 0.0
  %83 = vmatpush1.msra.mxu0 0.0
  %84 = vmatprep.subr.mxu0 0.0
  %85 = vmatpush1.msra.mxu0 0.0
  %86 = vmatprep.subr.mxu0 0.0
  %87 = vmatpush1.msra.mxu0 0.0
  %88 = vmatprep.subr.mxu0 0.0
  %89 = vmatpush1.msra.mxu0 0.0
  %90 = vmatprep.subr.mxu0 0.0
  %91 = vmatpush1.msra.mxu0 0.0
  %92 = vmatprep.subr.mxu0 0.0
  %93 = vmatpush1.msra.mxu0 0.0
  %94 = vmatprep.subr.mxu0 0.0
  %95 = vmatpush1.msra.mxu0 0.0
  %96 = vmatprep.subr.mxu0 0.0
  %97 = vmatpush1.msra.mxu0 0.0
  %98 = vmatprep.subr.mxu0 0.0
  %99 = vmatpush1.msra.mxu0 0.0
  %100 = vmatprep.subr.mxu0 0.0
  %101 = vmatpush1.msra.mxu0 0.0
  %102 = vmatprep.subr.mxu0 0.0
  %103 = vmatpush1.msra.mxu0 0.0
  %104 = vmatprep.subr.mxu0 0.0
  %105 = vmatpush1.msra.mxu0 0.0
  %106 = vmatprep.subr.mxu0 0.0
  %107 = vmatpush1.msra.mxu0 0.0
  %108 = vmatprep.subr.mxu0 0.0
  %109 = vmatpush1.msra.mxu0 0.0
  %110 = vmatprep.subr.mxu0 0.0
  %111 = vmatpush1.msra.mxu0 0.0
  %112 = vmatprep.subr.mxu0 0.0
  %113 = vmatpush1.msra.mxu0 0.0
  %114 = vmatprep.mubr.f32.mxu0 0.0
  %115 = vmatmul.mubr.f32.gmra.mrb[0].mxu0 %v45
  %v116 = vpop.f32.mrb[0].mxu0
  %v117 = vadd.f32 0.0, %v116
  %v118 = vpop.f32.mrb[0].mxu0
  %119 = vmatprep.mubr.f32.mxu0 0.0
  %120 = vmatmul.mubr.f32.gmra.mrb[0].mxu0 %v48
  %v121 = vpop.f32.mrb[0].mxu0
  %v122 = vadd.f32 0.0, %v121
  %v123 = vpop.f32.mrb[0].mxu0
  %124 = vdwg.mxu0
  %v125 = vld [vmem:[%s3] sm:$0xff]
  %v126 = vld [vmem:[%s3 + $0x8] sm:$0xff]
  %v127 = vld [vmem:[%s3 + $0x10] sm:$0xff]
  %v128 = vld [vmem:[%s3 + $0x18] sm:$0xff]
  %vm129 = vcmask 261120
  %v131 = vsel %vm129, %v117, 0
  %v134 = vsel %vm129, %v122, 0
  %136 = vmatprep.subr.mxu0 0.0
  %137 = vmatpush1.msra.mxu0 %v125
  %138 = vmatprep.subr.mxu0 0.0
  %139 = vmatpush1.msra.mxu0 %v126
  %140 = vmatprep.subr.mxu0 0.0
  %141 = vmatpush1.msra.mxu0 %v127
  %142 = vmatprep.subr.mxu0 0.0
  %143 = vmatpush1.msra.mxu0 %v128
  %144 = vmatprep.subr.mxu0 0.0
  %145 = vmatpush1.msra.mxu0 0.0
  %146 = vmatprep.subr.mxu0 0.0
  %147 = vmatpush1.msra.mxu0 0.0
  %148 = vmatprep.subr.mxu0 0.0
  %149 = vmatpush1.msra.mxu0 0.0
  %150 = vmatprep.subr.mxu0 0.0
  %151 = vmatpush1.msra.mxu0 0.0
  %152 = vmatprep.subr.mxu0 0.0
  %153 = vmatpush1.msra.mxu0 0.0
  %154 = vmatprep.subr.mxu0 0.0
  %155 = vmatpush1.msra.mxu0 0.0
  %156 = vmatprep.subr.mxu0 0.0
  %157 = vmatpush1.msra.mxu0 0.0
  %158 = vmatprep.subr.mxu0 0.0
  %159 = vmatpush1.msra.mxu0 0.0
  %160 = vmatprep.subr.mxu0 0.0
  %161 = vmatpush1.msra.mxu0 0.0
  %162 = vmatprep.subr.mxu0 0.0
  %163 = vmatpush1.msra.mxu0 0.0
  %164 = vmatprep.subr.mxu0 0.0
  %165 = vmatpush1.msra.mxu0 0.0
  %166 = vmatprep.subr.mxu0 0.0
  %167 = vmatpush1.msra.mxu0 0.0
  %168 = vmatprep.subr.mxu0 0.0
  %169 = vmatpush1.msra.mxu0 0.0
  %170 = vmatprep.subr.mxu0 0.0
  %171 = vmatpush1.msra.mxu0 0.0
  %172 = vmatprep.subr.mxu0 0.0
  %173 = vmatpush1.msra.mxu0 0.0
  %174 = vmatprep.subr.mxu0 0.0
  %175 = vmatpush1.msra.mxu0 0.0
  %176 = vmatprep.subr.mxu0 0.0
  %177 = vmatpush1.msra.mxu0 0.0
  %178 = vmatprep.subr.mxu0 0.0
  %179 = vmatpush1.msra.mxu0 0.0
  %180 = vmatprep.subr.mxu0 0.0
  %181 = vmatpush1.msra.mxu0 0.0
  %182 = vmatprep.subr.mxu0 0.0
  %183 = vmatpush1.msra.mxu0 0.0
  %184 = vmatprep.subr.mxu0 0.0
  %185 = vmatpush1.msra.mxu0 0.0
  %186 = vmatprep.subr.mxu0 0.0
  %187 = vmatpush1.msra.mxu0 0.0
  %188 = vmatprep.subr.mxu0 0.0
  %189 = vmatpush1.msra.mxu0 0.0
  %190 = vmatprep.subr.mxu0 0.0
  %191 = vmatpush1.msra.mxu0 0.0
  %192 = vmatprep.subr.mxu0 0.0
  %193 = vmatpush1.msra.mxu0 0.0
  %194 = vmatprep.subr.mxu0 0.0
  %195 = vmatpush1.msra.mxu0 0.0
  %196 = vmatprep.subr.mxu0 0.0
  %197 = vmatpush1.msra.mxu0 0.0
  %198 = vmatprep.subr.mxu0 0.0
  %199 = vmatpush1.msra.mxu0 0.0
  %200 = vmatprep.mubr.f32.mxu0 0.0
  %201 = vmatmul.mubr.f32.gmra.mrb[0].mxu0 %v131
  %v202 = vpop.f32.mrb[0].mxu0
  %v203 = vadd.f32 0.0, %v202
  %v204 = vpop.f32.mrb[0].mxu0
  %205 = vmatprep.mubr.f32.mxu0 0.0
  %206 = vmatmul.mubr.f32.gmra.mrb[0].mxu0 %v134
  %v207 = vpop.f32.mrb[0].mxu0
  %v208 = vadd.f32 0.0, %v207
  %v209 = vpop.f32.mrb[0].mxu0
  %210 = vdwg.mxu0
  %v211 = vld [vmem:[%s4] sm:$0xff]
  %v212 = vld [vmem:[%s4 + $0x8] sm:$0xff]
  %v213 = vld [vmem:[%s4 + $0x10] sm:$0xff]
  %v214 = vld [vmem:[%s4 + $0x18] sm:$0xff]
  %215 = vmatprep.subr.mxu0 0.0
  %216 = vmatpush1.msra.mxu0 %v211
  %217 = vmatprep.subr.mxu0 0.0
  %218 = vmatpush1.msra.mxu0 %v212
  %219 = vmatprep.subr.mxu0 0.0
  %220 = vmatpush1.msra.mxu0 %v213
  %221 = vmatprep.subr.mxu0 0.0
  %222 = vmatpush1.msra.mxu0 %v214
  %223 = vmatprep.subr.mxu0 0.0
  %224 = vmatpush1.msra.mxu0 0.0
  %225 = vmatprep.subr.mxu0 0.0
  %226 = vmatpush1.msra.mxu0 0.0
  %227 = vmatprep.subr.mxu0 0.0
  %228 = vmatpush1.msra.mxu0 0.0
  %229 = vmatprep.subr.mxu0 0.0
  %230 = vmatpush1.msra.mxu0 0.0
  %231 = vmatprep.subr.mxu0 0.0
  %232 = vmatpush1.msra.mxu0 0.0
  %233 = vmatprep.subr.mxu0 0.0
  %234 = vmatpush1.msra.mxu0 0.0
  %235 = vmatprep.subr.mxu0 0.0
  %236 = vmatpush1.msra.mxu0 0.0
  %237 = vmatprep.subr.mxu0 0.0
  %238 = vmatpush1.msra.mxu0 0.0
  %239 = vmatprep.subr.mxu0 0.0
  %240 = vmatpush1.msra.mxu0 0.0
  %241 = vmatprep.subr.mxu0 0.0
  %242 = vmatpush1.msra.mxu0 0.0
  %243 = vmatprep.subr.mxu0 0.0
  %244 = vmatpush1.msra.mxu0 0.0
  %245 = vmatprep.subr.mxu0 0.0
  %246 = vmatpush1.msra.mxu0 0.0
  %247 = vmatprep.subr.mxu0 0.0
  %248 = vmatpush1.msra.mxu0 0.0
  %249 = vmatprep.subr.mxu0 0.0
  %250 = vmatpush1.msra.mxu0 0.0
  %251 = vmatprep.subr.mxu0 0.0
  %252 = vmatpush1.msra.mxu0 0.0
  %253 = vmatprep.subr.mxu0 0.0
  %254 = vmatpush1.msra.mxu0 0.0
  %255 = vmatprep.subr.mxu0 0.0
  %256 = vmatpush1.msra.mxu0 0.0
  %257 = vmatprep.subr.mxu0 0.0
  %258 = vmatpush1.msra.mxu0 0.0
  %259 = vmatprep.subr.mxu0 0.0
  %260 = vmatpush1.msra.mxu0 0.0
  %261 = vmatprep.subr.mxu0 0.0
  %262 = vmatpush1.msra.mxu0 0.0
  %263 = vmatprep.subr.mxu0 0.0
  %264 = vmatpush1.msra.mxu0 0.0
  %265 = vmatprep.subr.mxu0 0.0
  %266 = vmatpush1.msra.mxu0 0.0
  %267 = vmatprep.subr.mxu0 0.0
  %268 = vmatpush1.msra.mxu0 0.0
  %269 = vmatprep.subr.mxu0 0.0
  %270 = vmatpush1.msra.mxu0 0.0
  %271 = vmatprep.subr.mxu0 0.0
  %272 = vmatpush1.msra.mxu0 0.0
  %273 = vmatprep.subr.mxu0 0.0
  %274 = vmatpush1.msra.mxu0 0.0
  %275 = vmatprep.subr.mxu0 0.0
  %276 = vmatpush1.msra.mxu0 0.0
  %277 = vmatprep.subr.mxu0 0.0
  %278 = vmatpush1.msra.mxu0 0.0
  %279 = vmatprep.mubr.f32.mxu0 0.0
  %280 = vmatmul.mubr.f32.gmra.mrb[0].mxu0 %v131
  %v281 = vpop.f32.mrb[0].mxu0
  %v282 = vadd.f32 0.0, %v281
  %v283 = vpop.f32.mrb[0].mxu0
  %284 = vmatprep.mubr.f32.mxu0 0.0
  %285 = vmatmul.mubr.f32.gmra.mrb[0].mxu0 %v134
  %v286 = vpop.f32.mrb[0].mxu0
  %v287 = vadd.f32 0.0, %v286
  %v288 = vpop.f32.mrb[0].mxu0
  %289 = vdwg.mxu0
  %290 = vxpose.xlu0.b32.start [1/16] %v203, 128
  %291 = vxpose.xlu0.b32.cont [2/16] %v208, 128
  %292 = vxpose.xlu0.b32.cont [3/16] 0.0, 128
  %293 = vxpose.xlu0.b32.cont [4/16] 0.0, 128
  %294 = vxpose.xlu0.b32.cont [5/16] 0.0, 128
  %295 = vxpose.xlu0.b32.cont [6/16] 0.0, 128
  %296 = vxpose.xlu0.b32.cont [7/16] 0.0, 128
  %297 = vxpose.xlu0.b32.cont [8/16] 0.0, 128
  %298 = vxpose.xlu0.b32.cont [9/16] 0.0, 128
  %299 = vxpose.xlu0.b32.cont [10/16] 0.0, 128
  %300 = vxpose.xlu0.b32.cont [11/16] 0.0, 128
  %301 = vxpose.xlu0.b32.cont [12/16] 0.0, 128
  %302 = vxpose.xlu0.b32.cont [13/16] 0.0, 128
  %303 = vxpose.xlu0.b32.cont [14/16] 0.0, 128
  %304 = vxpose.xlu0.b32.cont [15/16] 0.0, 128
  %305 = vxpose.xlu0.b32.end [16/16] 0.0, 128
  %v306 = vpop.trf.xlu0
  %v307 = vpop.trf.xlu0
  %v308 = vpop.trf.xlu0
  %v309 = vpop.trf.xlu0
  %v310 = vpop.trf.xlu0
  %v311 = vpop.trf.xlu0
  %v312 = vpop.trf.xlu0
  %v313 = vpop.trf.xlu0
  %v314 = vpop.trf.xlu0
  %v315 = vpop.trf.xlu0
  %v316 = vpop.trf.xlu0
  %v317 = vpop.trf.xlu0
  %v318 = vpop.trf.xlu0
  %v319 = vpop.trf.xlu0
  %v320 = vpop.trf.xlu0
  %v321 = vpop.trf.xlu0
  %v322 = vld [vmem:[%s0] sm:$0xff]
  %v323 = vld [vmem:[%s0 + $0x8] sm:$0xff]
  %vm324 = vcmp.gt.f32.partialorder %v322, 0.0
  %vm325 = vcmp.gt.f32.partialorder %v323, 0.0
  %327 = vset.pattern.permute.xlu0 0
  %328 = vperm.xlu0 %327, %v282
  %v329 = vpop.permute.xlu0 %328
  %332 = vset.pattern.permute.xlu0 0
  %333 = vperm.xlu0 %332, %v287
  %v334 = vpop.permute.xlu0 %333
  %v336 = vlaneseq
  %v337 = vshrl.u32 %v336, 7
  %v338 = vsub.s32 0, %v337
  %v339 = vrot.slane %v306, %v338
  %v340 = vadd.f32 %v329, %v339
  %v341 = vadd.f32 %v334, %v339
  %vm342 = vcmp.ge.f32.partialorder %v340, 0.0
  %vm343 = vcmp.ge.f32.partialorder %v341, 0.0
  %v344 = vmul.f32 %v340, 0.2
  %v345 = vmul.f32 %v341, 0.2
  %v346 = vsel %vm342, %v340, %v344
  %v347 = vsel %vm343, %v341, %v345
  %v348 = vsel %vm324, %v346, -1e+30
  %v349 = vsel %vm325, %v347, -1e+30
  %vm350 = vcmask 130048
  %v351 = vsel %vm350, %v348, -inf
  %352 = vmax.xlane.f32.xlu0 %v351
  %v353 = vpop.xlane.xlu0 %352
  %v354 = vsel %vm350, %v349, -inf
  %355 = vmax.xlane.f32.xlu0 %v354
  %v356 = vpop.xlane.xlu0 %355
  %v357 = vsub.f32 %v348, %v353
  %v358 = vsub.f32 %v349, %v356
  %v359 = vmul.f32 %v357, 1.442695
  %v360 = vpow.pop %v359
  %v361 = vmul.f32 %v358, 1.442695
  %v362 = vpow.pop %v361
  %v363 = vsel %vm350, %v360, 0.0
  %364 = vadd.xlane.f32.xlu0 %v363
  %v365 = vpop.xlane.xlu0 %364
  %v366 = vsel %vm350, %v362, 0.0
  %367 = vadd.xlane.f32.xlu0 %v366
  %v368 = vpop.xlane.xlu0 %367
  %v369 = vrcp.pop %v365
  %v370 = vrcp.pop %v368
  %v372 = vsel %vm350, %v360, 0
  %v375 = vsel %vm350, %v362, 0
  %377 = vmatprep.subr.mxu0 0.0
  %378 = vmatpush1.msra.mxu0 %v117
  %379 = vmatprep.subr.mxu0 0.0
  %380 = vmatpush1.msra.mxu0 %v122
  %381 = vmatprep.subr.mxu0 0.0
  %382 = vmatpush1.msra.mxu0 0.0
  %383 = vmatprep.subr.mxu0 0.0
  %384 = vmatpush1.msra.mxu0 0.0
  %385 = vmatprep.subr.mxu0 0.0
  %386 = vmatpush1.msra.mxu0 0.0
  %387 = vmatprep.subr.mxu0 0.0
  %388 = vmatpush1.msra.mxu0 0.0
  %389 = vmatprep.subr.mxu0 0.0
  %390 = vmatpush1.msra.mxu0 0.0
  %391 = vmatprep.subr.mxu0 0.0
  %392 = vmatpush1.msra.mxu0 0.0
  %393 = vmatprep.subr.mxu0 0.0
  %394 = vmatpush1.msra.mxu0 0.0
  %395 = vmatprep.subr.mxu0 0.0
  %396 = vmatpush1.msra.mxu0 0.0
  %397 = vmatprep.subr.mxu0 0.0
  %398 = vmatpush1.msra.mxu0 0.0
  %399 = vmatprep.subr.mxu0 0.0
  %400 = vmatpush1.msra.mxu0 0.0
  %401 = vmatprep.subr.mxu0 0.0
  %402 = vmatpush1.msra.mxu0 0.0
  %403 = vmatprep.subr.mxu0 0.0
  %404 = vmatpush1.msra.mxu0 0.0
  %405 = vmatprep.subr.mxu0 0.0
  %406 = vmatpush1.msra.mxu0 0.0
  %407 = vmatprep.subr.mxu0 0.0
  %408 = vmatpush1.msra.mxu0 0.0
  %409 = vmatprep.subr.mxu0 0.0
  %410 = vmatpush1.msra.mxu0 0.0
  %411 = vmatprep.subr.mxu0 0.0
  %412 = vmatpush1.msra.mxu0 0.0
  %413 = vmatprep.subr.mxu0 0.0
  %414 = vmatpush1.msra.mxu0 0.0
  %415 = vmatprep.subr.mxu0 0.0
  %416 = vmatpush1.msra.mxu0 0.0
  %417 = vmatprep.subr.mxu0 0.0
  %418 = vmatpush1.msra.mxu0 0.0
  %419 = vmatprep.subr.mxu0 0.0
  %420 = vmatpush1.msra.mxu0 0.0
  %421 = vmatprep.subr.mxu0 0.0
  %422 = vmatpush1.msra.mxu0 0.0
  %423 = vmatprep.subr.mxu0 0.0
  %424 = vmatpush1.msra.mxu0 0.0
  %425 = vmatprep.subr.mxu0 0.0
  %426 = vmatpush1.msra.mxu0 0.0
  %427 = vmatprep.subr.mxu0 0.0
  %428 = vmatpush1.msra.mxu0 0.0
  %429 = vmatprep.subr.mxu0 0.0
  %430 = vmatpush1.msra.mxu0 0.0
  %431 = vmatprep.subr.mxu0 0.0
  %432 = vmatpush1.msra.mxu0 0.0
  %433 = vmatprep.subr.mxu0 0.0
  %434 = vmatpush1.msra.mxu0 0.0
  %435 = vmatprep.subr.mxu0 0.0
  %436 = vmatpush1.msra.mxu0 0.0
  %437 = vmatprep.subr.mxu0 0.0
  %438 = vmatpush1.msra.mxu0 0.0
  %439 = vmatprep.subr.mxu0 0.0
  %440 = vmatpush1.msra.mxu0 0.0
  %441 = vmatprep.mubr.f32.mxu0 0.0
  %442 = vmatmul.mubr.f32.gmra.mrb[0].mxu0 %v372
  %v443 = vpop.f32.mrb[0].mxu0
  %v444 = vadd.f32 0.0, %v443
  %v445 = vpop.f32.mrb[0].mxu0
  %446 = vmatprep.mubr.f32.mxu0 0.0
  %447 = vmatmul.mubr.f32.gmra.mrb[0].mxu0 %v375
  %v448 = vpop.f32.mrb[0].mxu0
  %v449 = vadd.f32 0.0, %v448
  %v450 = vpop.f32.mrb[0].mxu0
  %451 = vdwg.mxu0
  %v452 = vmul.f32 %v444, %v369
  %v453 = vmul.f32 %v449, %v370
  %vm454 = vcmp.gt.f32.partialorder %v452, 0.0
  %vm455 = vcmp.gt.f32.partialorder %v453, 0.0
  %v456 = vmin.f32 %v452, 0.0
  %v457 = vmin.f32 %v453, 0.0
  %v458 = vmul.f32 %v456, 1.442695
  %v459 = vpow.pop %v458
  %v460 = vmul.f32 %v457, 1.442695
  %v461 = vpow.pop %v460
  %v462 = vsub.f32 %v459, 1.0
  %v463 = vsub.f32 %v461, 1.0
  %v464 = vsel %vm454, %v452, %v462
  %v465 = vsel %vm455, %v453, %v463
  %466 = vst.msk [vmem:[#allocation2] sm:$0xff] %vm43, %v464
  %467 = vst.msk [vmem:[#allocation2 + $0x8] sm:$0xff] %vm43, %v465
  %468 = vset.pattern.permute.xlu0 1
  %469 = vperm.xlu0 %468, %v282
  %v470 = vpop.permute.xlu0 %469
  %472 = vset.pattern.permute.xlu0 1
  %473 = vperm.xlu0 %472, %v287
  %v474 = vpop.permute.xlu0 %473
  %v476 = vlaneseq
  %v477 = vshrl.u32 %v476, 7
  %v478 = vsub.s32 1, %v477
  %v479 = vrot.slane %v306, %v478
  %v480 = vadd.f32 %v470, %v479
  %v481 = vadd.f32 %v474, %v479
  %vm482 = vcmp.ge.f32.partialorder %v480, 0.0
  %vm483 = vcmp.ge.f32.partialorder %v481, 0.0
  %v484 = vmul.f32 %v480, 0.2
  %v485 = vmul.f32 %v481, 0.2
  %v486 = vsel %vm482, %v480, %v484
  %v487 = vsel %vm483, %v481, %v485
  %v488 = vsel %vm324, %v486, -1e+30
  %v489 = vsel %vm325, %v487, -1e+30
  %v490 = vsel %vm350, %v488, -inf
  %491 = vmax.xlane.f32.xlu0 %v490
  %v492 = vpop.xlane.xlu0 %491
  %v493 = vsel %vm350, %v489, -inf
  %494 = vmax.xlane.f32.xlu0 %v493
  %v495 = vpop.xlane.xlu0 %494
  %v496 = vsub.f32 %v488, %v492
  %v497 = vsub.f32 %v489, %v495
  %v498 = vmul.f32 %v496, 1.442695
  %v499 = vpow.pop %v498
  %v500 = vmul.f32 %v497, 1.442695
  %v501 = vpow.pop %v500
  %v502 = vsel %vm350, %v499, 0.0
  %503 = vadd.xlane.f32.xlu0 %v502
  %v504 = vpop.xlane.xlu0 %503
  %v505 = vsel %vm350, %v501, 0.0
  %506 = vadd.xlane.f32.xlu0 %v505
  %v507 = vpop.xlane.xlu0 %506
  %v508 = vrcp.pop %v504
  %v509 = vrcp.pop %v507
  %510 = vrot.lane.b32.xlu0 %v117, 120
  %v511 = vpop.permute.xlu0 %510
  %512 = vrot.lane.b32.xlu0 %v122, 120
  %v513 = vpop.permute.xlu0 %512
  %v517 = vsel %vm350, %v499, 0
  %v520 = vsel %vm350, %v501, 0
  %522 = vmatprep.subr.mxu0 0.0
  %523 = vmatpush1.msra.mxu0 %v511
  %524 = vmatprep.subr.mxu0 0.0
  %525 = vmatpush1.msra.mxu0 %v513
  %526 = vmatprep.subr.mxu0 0.0
  %527 = vmatpush1.msra.mxu0 0.0
  %528 = vmatprep.subr.mxu0 0.0
  %529 = vmatpush1.msra.mxu0 0.0
  %530 = vmatprep.subr.mxu0 0.0
  %531 = vmatpush1.msra.mxu0 0.0
  %532 = vmatprep.subr.mxu0 0.0
  %533 = vmatpush1.msra.mxu0 0.0
  %534 = vmatprep.subr.mxu0 0.0
  %535 = vmatpush1.msra.mxu0 0.0
  %536 = vmatprep.subr.mxu0 0.0
  %537 = vmatpush1.msra.mxu0 0.0
  %538 = vmatprep.subr.mxu0 0.0
  %539 = vmatpush1.msra.mxu0 0.0
  %540 = vmatprep.subr.mxu0 0.0
  %541 = vmatpush1.msra.mxu0 0.0
  %542 = vmatprep.subr.mxu0 0.0
  %543 = vmatpush1.msra.mxu0 0.0
  %544 = vmatprep.subr.mxu0 0.0
  %545 = vmatpush1.msra.mxu0 0.0
  %546 = vmatprep.subr.mxu0 0.0
  %547 = vmatpush1.msra.mxu0 0.0
  %548 = vmatprep.subr.mxu0 0.0
  %549 = vmatpush1.msra.mxu0 0.0
  %550 = vmatprep.subr.mxu0 0.0
  %551 = vmatpush1.msra.mxu0 0.0
  %552 = vmatprep.subr.mxu0 0.0
  %553 = vmatpush1.msra.mxu0 0.0
  %554 = vmatprep.subr.mxu0 0.0
  %555 = vmatpush1.msra.mxu0 0.0
  %556 = vmatprep.subr.mxu0 0.0
  %557 = vmatpush1.msra.mxu0 0.0
  %558 = vmatprep.subr.mxu0 0.0
  %559 = vmatpush1.msra.mxu0 0.0
  %560 = vmatprep.subr.mxu0 0.0
  %561 = vmatpush1.msra.mxu0 0.0
  %562 = vmatprep.subr.mxu0 0.0
  %563 = vmatpush1.msra.mxu0 0.0
  %564 = vmatprep.subr.mxu0 0.0
  %565 = vmatpush1.msra.mxu0 0.0
  %566 = vmatprep.subr.mxu0 0.0
  %567 = vmatpush1.msra.mxu0 0.0
  %568 = vmatprep.subr.mxu0 0.0
  %569 = vmatpush1.msra.mxu0 0.0
  %570 = vmatprep.subr.mxu0 0.0
  %571 = vmatpush1.msra.mxu0 0.0
  %572 = vmatprep.subr.mxu0 0.0
  %573 = vmatpush1.msra.mxu0 0.0
  %574 = vmatprep.subr.mxu0 0.0
  %575 = vmatpush1.msra.mxu0 0.0
  %576 = vmatprep.subr.mxu0 0.0
  %577 = vmatpush1.msra.mxu0 0.0
  %578 = vmatprep.subr.mxu0 0.0
  %579 = vmatpush1.msra.mxu0 0.0
  %580 = vmatprep.subr.mxu0 0.0
  %581 = vmatpush1.msra.mxu0 0.0
  %582 = vmatprep.subr.mxu0 0.0
  %583 = vmatpush1.msra.mxu0 0.0
  %584 = vmatprep.subr.mxu0 0.0
  %585 = vmatpush1.msra.mxu0 0.0
  %586 = vmatprep.mubr.f32.mxu0 0.0
  %587 = vmatmul.mubr.f32.gmra.mrb[0].mxu0 %v517
  %v588 = vpop.f32.mrb[0].mxu0
  %v589 = vadd.f32 0.0, %v588
  %v590 = vpop.f32.mrb[0].mxu0
  %591 = vmatprep.mubr.f32.mxu0 0.0
  %592 = vmatmul.mubr.f32.gmra.mrb[0].mxu0 %v520
  %v593 = vpop.f32.mrb[0].mxu0
  %v594 = vadd.f32 0.0, %v593
  %v595 = vpop.f32.mrb[0].mxu0
  %596 = vdwg.mxu0
  %v597 = vmul.f32 %v589, %v508
  %v598 = vmul.f32 %v594, %v509
  %vm599 = vcmp.gt.f32.partialorder %v597, 0.0
  %vm600 = vcmp.gt.f32.partialorder %v598, 0.0
  %v601 = vmin.f32 %v597, 0.0
  %v602 = vmin.f32 %v598, 0.0
  %v603 = vmul.f32 %v601, 1.442695
  %v604 = vpow.pop %v603
  %v605 = vmul.f32 %v602, 1.442695
  %v606 = vpow.pop %v605
  %v607 = vsub.f32 %v604, 1.0
  %v608 = vsub.f32 %v606, 1.0
  %v609 = vsel %vm599, %v597, %v607
  %v610 = vsel %vm600, %v598, %v608
  %613 = vrot.lane.b32.xlu0 %v609, 8
  %v614 = vpop.permute.xlu0 %613
  %615 = vrot.lane.b32.xlu0 %v610, 8
  %v616 = vpop.permute.xlu0 %615
  %vm619 = vcmask 130112
  %620 = vst.msk [vmem:[#allocation2] sm:$0xff] %vm619, %v614
  %621 = vst.msk [vmem:[#allocation2 + $0x8] sm:$0xff] %vm619, %v616
  %s622 = scalar_lea.vmem %s0, 16
  %v623 = vld [vmem:[%s622] sm:$0xff]
  %v624 = vld [vmem:[%s622 + $0x8] sm:$0xff]
  %vm625 = vcmp.gt.f32.partialorder %v623, 0.0
  %vm626 = vcmp.gt.f32.partialorder %v624, 0.0
  %627 = vset.pattern.permute.xlu0 2
  %628 = vperm.xlu0 %627, %v282
  %v629 = vpop.permute.xlu0 %628
  %631 = vset.pattern.permute.xlu0 2
  %632 = vperm.xlu0 %631, %v287
  %v633 = vpop.permute.xlu0 %632
  %v635 = vlaneseq
  %v636 = vshrl.u32 %v635, 7
  %v637 = vsub.s32 2, %v636
  %v638 = vrot.slane %v306, %v637
  %v639 = vadd.f32 %v629, %v638
  %v640 = vadd.f32 %v633, %v638
  %vm641 = vcmp.ge.f32.partialorder %v639, 0.0
  %vm642 = vcmp.ge.f32.partialorder %v640, 0.0
  %v643 = vmul.f32 %v639, 0.2
  %v644 = vmul.f32 %v640, 0.2
  %v645 = vsel %vm641, %v639, %v643
  %v646 = vsel %vm642, %v640, %v644
  %v647 = vsel %vm625, %v645, -1e+30
  %v648 = vsel %vm626, %v646, -1e+30
  %v649 = vsel %vm350, %v647, -inf
  %650 = vmax.xlane.f32.xlu0 %v649
  %v651 = vpop.xlane.xlu0 %650
  %v652 = vsel %vm350, %v648, -inf
  %653 = vmax.xlane.f32.xlu0 %v652
  %v654 = vpop.xlane.xlu0 %653
  %v655 = vsub.f32 %v647, %v651
  %v656 = vsub.f32 %v648, %v654
  %v657 = vmul.f32 %v655, 1.442695
  %v658 = vpow.pop %v657
  %v659 = vmul.f32 %v656, 1.442695
  %v660 = vpow.pop %v659
  %v661 = vsel %vm350, %v658, 0.0
  %662 = vadd.xlane.f32.xlu0 %v661
  %v663 = vpop.xlane.xlu0 %662
  %v664 = vsel %vm350, %v660, 0.0
  %665 = vadd.xlane.f32.xlu0 %v664
  %v666 = vpop.xlane.xlu0 %665
  %v667 = vrcp.pop %v663
  %v668 = vrcp.pop %v666
  %669 = vrot.lane.b32.xlu0 %v117, 112
  %v670 = vpop.permute.xlu0 %669
  %671 = vrot.lane.b32.xlu0 %v122, 112
  %v672 = vpop.permute.xlu0 %671
  %v676 = vsel %vm350, %v658, 0
  %v679 = vsel %vm350, %v660, 0
  %681 = vmatprep.subr.mxu0 0.0
  %682 = vmatpush1.msra.mxu0 %v670
  %683 = vmatprep.subr.mxu0 0.0
  %684 = vmatpush1.msra.mxu0 %v672
  %685 = vmatprep.subr.mxu0 0.0
  %686 = vmatpush1.msra.mxu0 0.0
  %687 = vmatprep.subr.mxu0 0.0
  %688 = vmatpush1.msra.mxu0 0.0
  %689 = vmatprep.subr.mxu0 0.0
  %690 = vmatpush1.msra.mxu0 0.0
  %691 = vmatprep.subr.mxu0 0.0
  %692 = vmatpush1.msra.mxu0 0.0
  %693 = vmatprep.subr.mxu0 0.0
  %694 = vmatpush1.msra.mxu0 0.0
  %695 = vmatprep.subr.mxu0 0.0
  %696 = vmatpush1.msra.mxu0 0.0
  %697 = vmatprep.subr.mxu0 0.0
  %698 = vmatpush1.msra.mxu0 0.0
  %699 = vmatprep.subr.mxu0 0.0
  %700 = vmatpush1.msra.mxu0 0.0
  %701 = vmatprep.subr.mxu0 0.0
  %702 = vmatpush1.msra.mxu0 0.0
  %703 = vmatprep.subr.mxu0 0.0
  %704 = vmatpush1.msra.mxu0 0.0
  %705 = vmatprep.subr.mxu0 0.0
  %706 = vmatpush1.msra.mxu0 0.0
  %707 = vmatprep.subr.mxu0 0.0
  %708 = vmatpush1.msra.mxu0 0.0
  %709 = vmatprep.subr.mxu0 0.0
  %710 = vmatpush1.msra.mxu0 0.0
  %711 = vmatprep.subr.mxu0 0.0
  %712 = vmatpush1.msra.mxu0 0.0
  %713 = vmatprep.subr.mxu0 0.0
  %714 = vmatpush1.msra.mxu0 0.0
  %715 = vmatprep.subr.mxu0 0.0
  %716 = vmatpush1.msra.mxu0 0.0
  %717 = vmatprep.subr.mxu0 0.0
  %718 = vmatpush1.msra.mxu0 0.0
  %719 = vmatprep.subr.mxu0 0.0
  %720 = vmatpush1.msra.mxu0 0.0
  %721 = vmatprep.subr.mxu0 0.0
  %722 = vmatpush1.msra.mxu0 0.0
  %723 = vmatprep.subr.mxu0 0.0
  %724 = vmatpush1.msra.mxu0 0.0
  %725 = vmatprep.subr.mxu0 0.0
  %726 = vmatpush1.msra.mxu0 0.0
  %727 = vmatprep.subr.mxu0 0.0
  %728 = vmatpush1.msra.mxu0 0.0
  %729 = vmatprep.subr.mxu0 0.0
  %730 = vmatpush1.msra.mxu0 0.0
  %731 = vmatprep.subr.mxu0 0.0
  %732 = vmatpush1.msra.mxu0 0.0
  %733 = vmatprep.subr.mxu0 0.0
  %734 = vmatpush1.msra.mxu0 0.0
  %735 = vmatprep.subr.mxu0 0.0
  %736 = vmatpush1.msra.mxu0 0.0
  %737 = vmatprep.subr.mxu0 0.0
  %738 = vmatpush1.msra.mxu0 0.0
  %739 = vmatprep.subr.mxu0 0.0
  %740 = vmatpush1.msra.mxu0 0.0
  %741 = vmatprep.subr.mxu0 0.0
  %742 = vmatpush1.msra.mxu0 0.0
  %743 = vmatprep.subr.mxu0 0.0
  %744 = vmatpush1.msra.mxu0 0.0
  %745 = vmatprep.mubr.f32.mxu0 0.0
  %746 = vmatmul.mubr.f32.gmra.mrb[0].mxu0 %v676
  %v747 = vpop.f32.mrb[0].mxu0
  %v748 = vadd.f32 0.0, %v747
  %v749 = vpop.f32.mrb[0].mxu0
  %750 = vmatprep.mubr.f32.mxu0 0.0
  %751 = vmatmul.mubr.f32.gmra.mrb[0].mxu0 %v679
  %v752 = vpop.f32.mrb[0].mxu0
  %v753 = vadd.f32 0.0, %v752
  %v754 = vpop.f32.mrb[0].mxu0
  %755 = vdwg.mxu0
  %v756 = vmul.f32 %v748, %v667
  %v757 = vmul.f32 %v753, %v668
  %vm758 = vcmp.gt.f32.partialorder %v756, 0.0
  %vm759 = vcmp.gt.f32.partialorder %v757, 0.0
  %v760 = vmin.f32 %v756, 0.0
  %v761 = vmin.f32 %v757, 0.0
  %v762 = vmul.f32 %v760, 1.442695
  %v763 = vpow.pop %v762
  %v764 = vmul.f32 %v761, 1.442695
  %v765 = vpow.pop %v764
  %v766 = vsub.f32 %v763, 1.0
  %v767 = vsub.f32 %v765, 1.0
  %v768 = vsel %vm758, %v756, %v766
  %v769 = vsel %vm759, %v757, %v767
  %770 = vst.msk [vmem:[#allocation2 + $0x10] sm:$0xff] %vm43, %v768
  %771 = vst.msk [vmem:[#allocation2 + $0x18] sm:$0xff] %vm43, %v769
  %772 = vset.pattern.permute.xlu0 3
  %773 = vperm.xlu0 %772, %v282
  %v774 = vpop.permute.xlu0 %773
  %776 = vset.pattern.permute.xlu0 3
  %777 = vperm.xlu0 %776, %v287
  %v778 = vpop.permute.xlu0 %777
  %v780 = vlaneseq
  %v781 = vshrl.u32 %v780, 7
  %v782 = vsub.s32 3, %v781
  %v783 = vrot.slane %v306, %v782
  %v784 = vadd.f32 %v774, %v783
  %v785 = vadd.f32 %v778, %v783
  %vm786 = vcmp.ge.f32.partialorder %v784, 0.0
  %vm787 = vcmp.ge.f32.partialorder %v785, 0.0
  %v788 = vmul.f32 %v784, 0.2
  %v789 = vmul.f32 %v785, 0.2
  %v790 = vsel %vm786, %v784, %v788
  %v791 = vsel %vm787, %v785, %v789
  %v792 = vsel %vm625, %v790, -1e+30
  %v793 = vsel %vm626, %v791, -1e+30
  %v794 = vsel %vm350, %v792, -inf
  %795 = vmax.xlane.f32.xlu0 %v794
  %v796 = vpop.xlane.xlu0 %795
  %v797 = vsel %vm350, %v793, -inf
  %798 = vmax.xlane.f32.xlu0 %v797
  %v799 = vpop.xlane.xlu0 %798
  %v800 = vsub.f32 %v792, %v796
  %v801 = vsub.f32 %v793, %v799
  %v802 = vmul.f32 %v800, 1.442695
  %v803 = vpow.pop %v802
  %v804 = vmul.f32 %v801, 1.442695
  %v805 = vpow.pop %v804
  %v806 = vsel %vm350, %v803, 0.0
  %807 = vadd.xlane.f32.xlu0 %v806
  %v808 = vpop.xlane.xlu0 %807
  %v809 = vsel %vm350, %v805, 0.0
  %810 = vadd.xlane.f32.xlu0 %v809
  %v811 = vpop.xlane.xlu0 %810
  %v812 = vrcp.pop %v808
  %v813 = vrcp.pop %v811
  %814 = vrot.lane.b32.xlu0 %v117, 104
  %v815 = vpop.permute.xlu0 %814
  %816 = vrot.lane.b32.xlu0 %v122, 104
  %v817 = vpop.permute.xlu0 %816
  %v821 = vsel %vm350, %v803, 0
  %v824 = vsel %vm350, %v805, 0
  %826 = vmatprep.subr.mxu0 0.0
  %827 = vmatpush1.msra.mxu0 %v815
  %828 = vmatprep.subr.mxu0 0.0
  %829 = vmatpush1.msra.mxu0 %v817
  %830 = vmatprep.subr.mxu0 0.0
  %831 = vmatpush1.msra.mxu0 0.0
  %832 = vmatprep.subr.mxu0 0.0
  %833 = vmatpush1.msra.mxu0 0.0
  %834 = vmatprep.subr.mxu0 0.0
  %835 = vmatpush1.msra.mxu0 0.0
  %836 = vmatprep.subr.mxu0 0.0
  %837 = vmatpush1.msra.mxu0 0.0
  %838 = vmatprep.subr.mxu0 0.0
  %839 = vmatpush1.msra.mxu0 0.0
  %840 = vmatprep.subr.mxu0 0.0
  %841 = vmatpush1.msra.mxu0 0.0
  %842 = vmatprep.subr.mxu0 0.0
  %843 = vmatpush1.msra.mxu0 0.0
  %844 = vmatprep.subr.mxu0 0.0
  %845 = vmatpush1.msra.mxu0 0.0
  %846 = vmatprep.subr.mxu0 0.0
  %847 = vmatpush1.msra.mxu0 0.0
  %848 = vmatprep.subr.mxu0 0.0
  %849 = vmatpush1.msra.mxu0 0.0
  %850 = vmatprep.subr.mxu0 0.0
  %851 = vmatpush1.msra.mxu0 0.0
  %852 = vmatprep.subr.mxu0 0.0
  %853 = vmatpush1.msra.mxu0 0.0
  %854 = vmatprep.subr.mxu0 0.0
  %855 = vmatpush1.msra.mxu0 0.0
  %856 = vmatprep.subr.mxu0 0.0
  %857 = vmatpush1.msra.mxu0 0.0
  %858 = vmatprep.subr.mxu0 0.0
  %859 = vmatpush1.msra.mxu0 0.0
  %860 = vmatprep.subr.mxu0 0.0
  %861 = vmatpush1.msra.mxu0 0.0
  %862 = vmatprep.subr.mxu0 0.0
  %863 = vmatpush1.msra.mxu0 0.0
  %864 = vmatprep.subr.mxu0 0.0
  %865 = vmatpush1.msra.mxu0 0.0
  %866 = vmatprep.subr.mxu0 0.0
  %867 = vmatpush1.msra.mxu0 0.0
  %868 = vmatprep.subr.mxu0 0.0
  %869 = vmatpush1.msra.mxu0 0.0
  %870 = vmatprep.subr.mxu0 0.0
  %871 = vmatpush1.msra.mxu0 0.0
  %872 = vmatprep.subr.mxu0 0.0
  %873 = vmatpush1.msra.mxu0 0.0
  %874 = vmatprep.subr.mxu0 0.0
  %875 = vmatpush1.msra.mxu0 0.0
  %876 = vmatprep.subr.mxu0 0.0
  %877 = vmatpush1.msra.mxu0 0.0
  %878 = vmatprep.subr.mxu0 0.0
  %879 = vmatpush1.msra.mxu0 0.0
  %880 = vmatprep.subr.mxu0 0.0
  %881 = vmatpush1.msra.mxu0 0.0
  %882 = vmatprep.subr.mxu0 0.0
  %883 = vmatpush1.msra.mxu0 0.0
  %884 = vmatprep.subr.mxu0 0.0
  %885 = vmatpush1.msra.mxu0 0.0
  %886 = vmatprep.subr.mxu0 0.0
  %887 = vmatpush1.msra.mxu0 0.0
  %888 = vmatprep.subr.mxu0 0.0
  %889 = vmatpush1.msra.mxu0 0.0
  %890 = vmatprep.mubr.f32.mxu0 0.0
  %891 = vmatmul.mubr.f32.gmra.mrb[0].mxu0 %v821
  %v892 = vpop.f32.mrb[0].mxu0
  %v893 = vadd.f32 0.0, %v892
  %v894 = vpop.f32.mrb[0].mxu0
  %895 = vmatprep.mubr.f32.mxu0 0.0
  %896 = vmatmul.mubr.f32.gmra.mrb[0].mxu0 %v824
  %v897 = vpop.f32.mrb[0].mxu0
  %v898 = vadd.f32 0.0, %v897
  %v899 = vpop.f32.mrb[0].mxu0
  %900 = vdwg.mxu0
  %v901 = vmul.f32 %v893, %v812
  %v902 = vmul.f32 %v898, %v813
  %vm903 = vcmp.gt.f32.partialorder %v901, 0.0
  %vm904 = vcmp.gt.f32.partialorder %v902, 0.0
  %v905 = vmin.f32 %v901, 0.0
  %v906 = vmin.f32 %v902, 0.0
  %v907 = vmul.f32 %v905, 1.442695
  %v908 = vpow.pop %v907
  %v909 = vmul.f32 %v906, 1.442695
  %v910 = vpow.pop %v909
  %v911 = vsub.f32 %v908, 1.0
  %v912 = vsub.f32 %v910, 1.0
  %v913 = vsel %vm903, %v901, %v911
  %v914 = vsel %vm904, %v902, %v912
  %917 = vrot.lane.b32.xlu0 %v913, 8
  %v918 = vpop.permute.xlu0 %917
  %919 = vrot.lane.b32.xlu0 %v914, 8
  %v920 = vpop.permute.xlu0 %919
  %923 = vst.msk [vmem:[#allocation2 + $0x10] sm:$0xff] %vm619, %v918
  %924 = vst.msk [vmem:[#allocation2 + $0x18] sm:$0xff] %vm619, %v920
  %v925 = vld [vmem:[#allocation2] sm:$0xff]
  %v926 = vld [vmem:[#allocation2 + $0x8] sm:$0xff]
  %v927 = vld [vmem:[#allocation2 + $0x10] sm:$0xff]
  %v928 = vld [vmem:[#allocation2 + $0x18] sm:$0xff]
  %v929 = vld [vmem:[%s5] sm:$0xff]
  %v930 = vld [vmem:[%s5 + $0x8] sm:$0xff]
  %v931 = vld [vmem:[%s6] sm:$0x1]
  %v933 = vlaneseq
  %v934 = vshrl.u32 %v933, 7
  %v935 = vsub.s32 0, %v934
  %v936 = vrot.slane %v931, %v935
  %v939 = vsel %vm350, %v925, 0
  %v942 = vsel %vm350, %v926, 0
  %v945 = vsel %vm350, %v927, 0
  %v948 = vsel %vm350, %v928, 0
  %950 = vmatprep.subr.mxu0 0.0
  %951 = vmatpush1.msra.mxu0 %v929
  %952 = vmatprep.subr.mxu0 0.0
  %953 = vmatpush1.msra.mxu0 %v930
  %954 = vmatprep.subr.mxu0 0.0
  %955 = vmatpush1.msra.mxu0 0.0
  %956 = vmatprep.subr.mxu0 0.0
  %957 = vmatpush1.msra.mxu0 0.0
  %958 = vmatprep.subr.mxu0 0.0
  %959 = vmatpush1.msra.mxu0 0.0
  %960 = vmatprep.subr.mxu0 0.0
  %961 = vmatpush1.msra.mxu0 0.0
  %962 = vmatprep.subr.mxu0 0.0
  %963 = vmatpush1.msra.mxu0 0.0
  %964 = vmatprep.subr.mxu0 0.0
  %965 = vmatpush1.msra.mxu0 0.0
  %966 = vmatprep.subr.mxu0 0.0
  %967 = vmatpush1.msra.mxu0 0.0
  %968 = vmatprep.subr.mxu0 0.0
  %969 = vmatpush1.msra.mxu0 0.0
  %970 = vmatprep.subr.mxu0 0.0
  %971 = vmatpush1.msra.mxu0 0.0
  %972 = vmatprep.subr.mxu0 0.0
  %973 = vmatpush1.msra.mxu0 0.0
  %974 = vmatprep.subr.mxu0 0.0
  %975 = vmatpush1.msra.mxu0 0.0
  %976 = vmatprep.subr.mxu0 0.0
  %977 = vmatpush1.msra.mxu0 0.0
  %978 = vmatprep.subr.mxu0 0.0
  %979 = vmatpush1.msra.mxu0 0.0
  %980 = vmatprep.subr.mxu0 0.0
  %981 = vmatpush1.msra.mxu0 0.0
  %982 = vmatprep.subr.mxu0 0.0
  %983 = vmatpush1.msra.mxu0 0.0
  %984 = vmatprep.subr.mxu0 0.0
  %985 = vmatpush1.msra.mxu0 0.0
  %986 = vmatprep.subr.mxu0 0.0
  %987 = vmatpush1.msra.mxu0 0.0
  %988 = vmatprep.subr.mxu0 0.0
  %989 = vmatpush1.msra.mxu0 0.0
  %990 = vmatprep.subr.mxu0 0.0
  %991 = vmatpush1.msra.mxu0 0.0
  %992 = vmatprep.subr.mxu0 0.0
  %993 = vmatpush1.msra.mxu0 0.0
  %994 = vmatprep.subr.mxu0 0.0
  %995 = vmatpush1.msra.mxu0 0.0
  %996 = vmatprep.subr.mxu0 0.0
  %997 = vmatpush1.msra.mxu0 0.0
  %998 = vmatprep.subr.mxu0 0.0
  %999 = vmatpush1.msra.mxu0 0.0
  %1000 = vmatprep.subr.mxu0 0.0
  %1001 = vmatpush1.msra.mxu0 0.0
  %1002 = vmatprep.subr.mxu0 0.0
  %1003 = vmatpush1.msra.mxu0 0.0
  %1004 = vmatprep.subr.mxu0 0.0
  %1005 = vmatpush1.msra.mxu0 0.0
  %1006 = vmatprep.subr.mxu0 0.0
  %1007 = vmatpush1.msra.mxu0 0.0
  %1008 = vmatprep.subr.mxu0 0.0
  %1009 = vmatpush1.msra.mxu0 0.0
  %1010 = vmatprep.subr.mxu0 0.0
  %1011 = vmatpush1.msra.mxu0 0.0
  %1012 = vmatprep.subr.mxu0 0.0
  %1013 = vmatpush1.msra.mxu0 0.0
  %1014 = vmatprep.mubr.f32.mxu0 0.0
  %1015 = vmatmul.mubr.f32.gmra.mrb[0].mxu0 %v939
  %v1016 = vpop.f32.mrb[0].mxu0
  %v1017 = vadd.f32 %v936, %v1016
  %v1018 = vpop.f32.mrb[0].mxu0
  %1019 = vmatprep.mubr.f32.mxu0 0.0
  %1020 = vmatmul.mubr.f32.gmra.mrb[0].mxu0 %v942
  %v1021 = vpop.f32.mrb[0].mxu0
  %v1022 = vadd.f32 %v936, %v1021
  %v1023 = vpop.f32.mrb[0].mxu0
  %1024 = vmatprep.mubr.f32.mxu0 0.0
  %1025 = vmatmul.mubr.f32.gmra.mrb[0].mxu0 %v945
  %v1026 = vpop.f32.mrb[0].mxu0
  %v1027 = vadd.f32 %v936, %v1026
  %v1028 = vpop.f32.mrb[0].mxu0
  %1029 = vmatprep.mubr.f32.mxu0 0.0
  %1030 = vmatmul.mubr.f32.gmra.mrb[0].mxu0 %v948
  %v1031 = vpop.f32.mrb[0].mxu0
  %v1032 = vadd.f32 %v936, %v1031
  %v1033 = vpop.f32.mrb[0].mxu0
  %1034 = vdwg.mxu0
  %v1035 = vtanh.pop %v1017
  %v1036 = vtanh.pop %v1022
  %v1037 = vtanh.pop %v1027
  %v1038 = vtanh.pop %v1032
  %v1039 = vld [vmem:[%s7] sm:$0xff]
  %v1040 = vld [vmem:[%s7 + $0x8] sm:$0xff]
  %v1041 = vld [vmem:[%s7 + $0x10] sm:$0xff]
  %v1042 = vld [vmem:[%s7 + $0x18] sm:$0xff]
  %v1043 = vld [vmem:[%s7 + $0x20] sm:$0xff]
  %v1044 = vld [vmem:[%s7 + $0x28] sm:$0xff]
  %v1045 = vld [vmem:[%s7 + $0x30] sm:$0xff]
  %v1046 = vld [vmem:[%s7 + $0x38] sm:$0xff]
  %v1047 = vld [vmem:[%s7 + $0x40] sm:$0xff]
  %v1048 = vld [vmem:[%s7 + $0x48] sm:$0xff]
  %v1049 = vld [vmem:[%s7 + $0x50] sm:$0xff]
  %v1050 = vld [vmem:[%s7 + $0x58] sm:$0xff]
  %v1051 = vld [vmem:[%s7 + $0x60] sm:$0xff]
  %v1052 = vld [vmem:[%s7 + $0x68] sm:$0xff]
  %v1053 = vld [vmem:[%s7 + $0x70] sm:$0xff]
  %v1054 = vld [vmem:[%s7 + $0x78] sm:$0xff]
  %v1055 = vld [vmem:[#allocation3] sm:$0x1]
  %v1057 = vlaneseq
  %v1058 = vshrl.u32 %v1057, 7
  %v1059 = vsub.s32 0, %v1058
  %v1060 = vrot.slane %v1055, %v1059
  %1062 = vmatprep.subr.mxu0 0.0
  %1063 = vmatpush1.msra.mxu0 %v1039
  %1064 = vmatprep.subr.mxu0 0.0
  %1065 = vmatpush1.msra.mxu0 %v1040
  %1066 = vmatprep.subr.mxu0 0.0
  %1067 = vmatpush1.msra.mxu0 %v1041
  %1068 = vmatprep.subr.mxu0 0.0
  %1069 = vmatpush1.msra.mxu0 %v1042
  %1070 = vmatprep.subr.mxu0 0.0
  %1071 = vmatpush1.msra.mxu0 %v1043
  %1072 = vmatprep.subr.mxu0 0.0
  %1073 = vmatpush1.msra.mxu0 %v1044
  %1074 = vmatprep.subr.mxu0 0.0
  %1075 = vmatpush1.msra.mxu0 %v1045
  %1076 = vmatprep.subr.mxu0 0.0
  %1077 = vmatpush1.msra.mxu0 %v1046
  %1078 = vmatprep.subr.mxu0 0.0
  %1079 = vmatpush1.msra.mxu0 %v1047
  %1080 = vmatprep.subr.mxu0 0.0
  %1081 = vmatpush1.msra.mxu0 %v1048
  %1082 = vmatprep.subr.mxu0 0.0
  %1083 = vmatpush1.msra.mxu0 %v1049
  %1084 = vmatprep.subr.mxu0 0.0
  %1085 = vmatpush1.msra.mxu0 %v1050
  %1086 = vmatprep.subr.mxu0 0.0
  %1087 = vmatpush1.msra.mxu0 %v1051
  %1088 = vmatprep.subr.mxu0 0.0
  %1089 = vmatpush1.msra.mxu0 %v1052
  %1090 = vmatprep.subr.mxu0 0.0
  %1091 = vmatpush1.msra.mxu0 %v1053
  %1092 = vmatprep.subr.mxu0 0.0
  %1093 = vmatpush1.msra.mxu0 %v1054
  %1094 = vmatprep.subr.mxu0 0.0
  %1095 = vmatpush1.msra.mxu0 0.0
  %1096 = vmatprep.subr.mxu0 0.0
  %1097 = vmatpush1.msra.mxu0 0.0
  %1098 = vmatprep.subr.mxu0 0.0
  %1099 = vmatpush1.msra.mxu0 0.0
  %1100 = vmatprep.subr.mxu0 0.0
  %1101 = vmatpush1.msra.mxu0 0.0
  %1102 = vmatprep.subr.mxu0 0.0
  %1103 = vmatpush1.msra.mxu0 0.0
  %1104 = vmatprep.subr.mxu0 0.0
  %1105 = vmatpush1.msra.mxu0 0.0
  %1106 = vmatprep.subr.mxu0 0.0
  %1107 = vmatpush1.msra.mxu0 0.0
  %1108 = vmatprep.subr.mxu0 0.0
  %1109 = vmatpush1.msra.mxu0 0.0
  %1110 = vmatprep.subr.mxu0 0.0
  %1111 = vmatpush1.msra.mxu0 0.0
  %1112 = vmatprep.subr.mxu0 0.0
  %1113 = vmatpush1.msra.mxu0 0.0
  %1114 = vmatprep.subr.mxu0 0.0
  %1115 = vmatpush1.msra.mxu0 0.0
  %1116 = vmatprep.subr.mxu0 0.0
  %1117 = vmatpush1.msra.mxu0 0.0
  %1118 = vmatprep.subr.mxu0 0.0
  %1119 = vmatpush1.msra.mxu0 0.0
  %1120 = vmatprep.subr.mxu0 0.0
  %1121 = vmatpush1.msra.mxu0 0.0
  %1122 = vmatprep.subr.mxu0 0.0
  %1123 = vmatpush1.msra.mxu0 0.0
  %1124 = vmatprep.subr.mxu0 0.0
  %1125 = vmatpush1.msra.mxu0 0.0
  %1126 = vmatprep.mubr.f32.mxu0 0.0
  %1127 = vmatmul.mubr.f32.gmra.mrb[0].mxu0 %v1035
  %v1128 = vpop.f32.mrb[0].mxu0
  %v1129 = vadd.f32 %v1060, %v1128
  %v1130 = vpop.f32.mrb[0].mxu0
  %1131 = vmatprep.mubr.f32.mxu0 0.0
  %1132 = vmatmul.mubr.f32.gmra.mrb[0].mxu0 %v1036
  %v1133 = vpop.f32.mrb[0].mxu0
  %v1134 = vadd.f32 %v1060, %v1133
  %v1135 = vpop.f32.mrb[0].mxu0
  %1136 = vmatprep.mubr.f32.mxu0 0.0
  %1137 = vmatmul.mubr.f32.gmra.mrb[0].mxu0 %v1037
  %v1138 = vpop.f32.mrb[0].mxu0
  %v1139 = vadd.f32 %v1060, %v1138
  %v1140 = vpop.f32.mrb[0].mxu0
  %1141 = vmatprep.mubr.f32.mxu0 0.0
  %1142 = vmatmul.mubr.f32.gmra.mrb[0].mxu0 %v1038
  %v1143 = vpop.f32.mrb[0].mxu0
  %v1144 = vadd.f32 %v1060, %v1143
  %v1145 = vpop.f32.mrb[0].mxu0
  %1146 = vdwg.mxu0
  %v1147 = vmax.f32 %v1129, %v1139
  %v1148 = vmax.f32 %v1134, %v1144
  %v1149 = vsub.f32 %v1129, %v1147
  %v1150 = vsub.f32 %v1134, %v1148
  %v1151 = vmul.f32 %v1149, 1.442695
  %v1152 = vpow.pop %v1151
  %v1153 = vmul.f32 %v1150, 1.442695
  %v1154 = vpow.pop %v1153
  %v1155 = vsub.f32 %v1139, %v1147
  %v1156 = vsub.f32 %v1144, %v1148
  %v1157 = vmul.f32 %v1155, 1.442695
  %v1158 = vpow.pop %v1157
  %v1159 = vmul.f32 %v1156, 1.442695
  %v1160 = vpow.pop %v1159
  %v1161 = vadd.f32 %v1152, %v1158
  %v1162 = vadd.f32 %v1154, %v1160
  %v1163 = vrcp.pop %v1161
  %v1164 = vrcp.pop %v1162
  %v1165 = vmul.f32 %v1152, %v1163
  %v1166 = vmul.f32 %v1154, %v1164
  %v1167 = vld [vmem:[#allocation2] sm:$0xff]
  %v1168 = vld [vmem:[#allocation2 + $0x8] sm:$0xff]
  %1170 = vset.pattern.permute.xlu0 0
  %1171 = vperm.xlu0 %1170, %v1165
  %v1172 = vpop.permute.xlu0 %1171
  %1175 = vset.pattern.permute.xlu0 0
  %1176 = vperm.xlu0 %1175, %v1166
  %v1177 = vpop.permute.xlu0 %1176
  %v1179 = vmul.f32 %v1172, %v1167
  %v1180 = vmul.f32 %v1177, %v1168
  %v1181 = vmul.f32 %v1158, %v1163
  %v1182 = vmul.f32 %v1160, %v1164
  %1184 = vset.pattern.permute.xlu0 0
  %1185 = vperm.xlu0 %1184, %v1181
  %v1186 = vpop.permute.xlu0 %1185
  %1189 = vset.pattern.permute.xlu0 0
  %1190 = vperm.xlu0 %1189, %v1182
  %v1191 = vpop.permute.xlu0 %1190
  %v1193 = vmul.f32 %v1186, %v927
  %v1194 = vmul.f32 %v1191, %v928
  %v1195 = vadd.f32 %v1179, %v1193
  %v1196 = vadd.f32 %v1180, %v1194
  %v1197 = vld [vmem:[%s9] sm:$0xff]
  %v1198 = vld [vmem:[%s9 + $0x8] sm:$0xff]
  %v1199 = vld [vmem:[%s10] sm:$0x1]
  %v1201 = vlaneseq
  %v1202 = vshrl.u32 %v1201, 7
  %v1203 = vsub.s32 0, %v1202
  %v1204 = vrot.slane %v1199, %v1203
  %v1207 = vsel %vm350, %v1195, 0
  %v1210 = vsel %vm350, %v1196, 0
  %1212 = vmatprep.subr.mxu0 0.0
  %1213 = vmatpush1.msra.mxu0 %v1197
  %1214 = vmatprep.subr.mxu0 0.0
  %1215 = vmatpush1.msra.mxu0 %v1198
  %1216 = vmatprep.subr.mxu0 0.0
  %1217 = vmatpush1.msra.mxu0 0.0
  %1218 = vmatprep.subr.mxu0 0.0
  %1219 = vmatpush1.msra.mxu0 0.0
  %1220 = vmatprep.subr.mxu0 0.0
  %1221 = vmatpush1.msra.mxu0 0.0
  %1222 = vmatprep.subr.mxu0 0.0
  %1223 = vmatpush1.msra.mxu0 0.0
  %1224 = vmatprep.subr.mxu0 0.0
  %1225 = vmatpush1.msra.mxu0 0.0
  %1226 = vmatprep.subr.mxu0 0.0
  %1227 = vmatpush1.msra.mxu0 0.0
  %1228 = vmatprep.subr.mxu0 0.0
  %1229 = vmatpush1.msra.mxu0 0.0
  %1230 = vmatprep.subr.mxu0 0.0
  %1231 = vmatpush1.msra.mxu0 0.0
  %1232 = vmatprep.subr.mxu0 0.0
  %1233 = vmatpush1.msra.mxu0 0.0
  %1234 = vmatprep.subr.mxu0 0.0
  %1235 = vmatpush1.msra.mxu0 0.0
  %1236 = vmatprep.subr.mxu0 0.0
  %1237 = vmatpush1.msra.mxu0 0.0
  %1238 = vmatprep.subr.mxu0 0.0
  %1239 = vmatpush1.msra.mxu0 0.0
  %1240 = vmatprep.subr.mxu0 0.0
  %1241 = vmatpush1.msra.mxu0 0.0
  %1242 = vmatprep.subr.mxu0 0.0
  %1243 = vmatpush1.msra.mxu0 0.0
  %1244 = vmatprep.subr.mxu0 0.0
  %1245 = vmatpush1.msra.mxu0 0.0
  %1246 = vmatprep.subr.mxu0 0.0
  %1247 = vmatpush1.msra.mxu0 0.0
  %1248 = vmatprep.subr.mxu0 0.0
  %1249 = vmatpush1.msra.mxu0 0.0
  %1250 = vmatprep.subr.mxu0 0.0
  %1251 = vmatpush1.msra.mxu0 0.0
  %1252 = vmatprep.subr.mxu0 0.0
  %1253 = vmatpush1.msra.mxu0 0.0
  %1254 = vmatprep.subr.mxu0 0.0
  %1255 = vmatpush1.msra.mxu0 0.0
  %1256 = vmatprep.subr.mxu0 0.0
  %1257 = vmatpush1.msra.mxu0 0.0
  %1258 = vmatprep.subr.mxu0 0.0
  %1259 = vmatpush1.msra.mxu0 0.0
  %1260 = vmatprep.subr.mxu0 0.0
  %1261 = vmatpush1.msra.mxu0 0.0
  %1262 = vmatprep.subr.mxu0 0.0
  %1263 = vmatpush1.msra.mxu0 0.0
  %1264 = vmatprep.subr.mxu0 0.0
  %1265 = vmatpush1.msra.mxu0 0.0
  %1266 = vmatprep.subr.mxu0 0.0
  %1267 = vmatpush1.msra.mxu0 0.0
  %1268 = vmatprep.subr.mxu0 0.0
  %1269 = vmatpush1.msra.mxu0 0.0
  %1270 = vmatprep.subr.mxu0 0.0
  %1271 = vmatpush1.msra.mxu0 0.0
  %1272 = vmatprep.subr.mxu0 0.0
  %1273 = vmatpush1.msra.mxu0 0.0
  %1274 = vmatprep.subr.mxu0 0.0
  %1275 = vmatpush1.msra.mxu0 0.0
  %1276 = vmatprep.mubr.f32.mxu0 0.0
  %1277 = vmatmul.mubr.f32.gmra.mrb[0].mxu0 %v1207
  %v1278 = vpop.f32.mrb[0].mxu0
  %v1279 = vadd.f32 %v1204, %v1278
  %v1280 = vpop.f32.mrb[0].mxu0
  %1281 = vmatprep.mubr.f32.mxu0 0.0
  %1282 = vmatmul.mubr.f32.gmra.mrb[0].mxu0 %v1210
  %v1283 = vpop.f32.mrb[0].mxu0
  %v1284 = vadd.f32 %v1204, %v1283
  %v1285 = vpop.f32.mrb[0].mxu0
  %1286 = vdwg.mxu0
  %1287 = vmax.xlane.f32.xlu0 %v1279
  %v1288 = vpop.xlane.xlu0 %1287
  %1289 = vmax.xlane.f32.xlu0 %v1284
  %v1290 = vpop.xlane.xlu0 %1289
  %v1291 = vsub.f32 %v1279, %v1288
  %v1292 = vsub.f32 %v1284, %v1290
  %v1293 = vmul.f32 %v1291, 1.442695
  %v1294 = vpow.pop %v1293
  %v1295 = vmul.f32 %v1292, 1.442695
  %v1296 = vpow.pop %v1295
  %1297 = vadd.xlane.f32.xlu0 %v1294
  %v1298 = vpop.xlane.xlu0 %1297
  %1299 = vadd.xlane.f32.xlu0 %v1296
  %v1300 = vpop.xlane.xlu0 %1299
  %v1301 = vlog2.pop %v1298
  %v1302 = vmul.f32 %v1301, 0.6931472
  %v1303 = vlog2.pop %v1300
  %v1304 = vmul.f32 %v1303, 0.6931472
  %v1305 = vadd.f32 %v1302, %v1288
  %v1306 = vadd.f32 %v1304, %v1290
  %v1307 = vsub.f32 %v1279, %v1305
  %v1308 = vsub.f32 %v1284, %v1306
  %1309 = vst [vmem:[%s11] sm:$0xff] %v1307
  %1310 = vst [vmem:[%s11 + $0x8] sm:$0xff] %v1308
  // Predicated region
  $region46: #{hgan_forward.1} parent=0 // pred_check
    _
  $region47: #{hgan_forward.1} parent=0 // pred_check_branch
    %1312 = sbr.rel (0) target = $region49
  $region48: #{hgan_forward.1} parent=0 // pred_region
    _
  $region49: #{hgan_forward.1} parent=0 // pred_fallthru
    _
  // Predicated region
  $region50: #{hgan_forward.1} parent=0 // pred_check
    _
  $region51: #{hgan_forward.1} parent=0 // pred_check_branch
    %1314 = sbr.rel (0) target = $region53
  $region52: #{hgan_forward.1} parent=0 // pred_region
    _
  $region53: #{hgan_forward.1} parent=0 // pred_fallthru
    _

</llo_original>
